<compile_context>
chip_gen: v7x
topology: tpu7x:2x2x1
jax: 0.10.0
libtpu: 0.0.40
codegen_flags: <defaults>
</compile_context>

<pallas_src>
import functools
import math

import jax
import jax.numpy as jnp
from jax.experimental import pallas as pl
from jax.experimental.pallas import tpu as pltpu


def ppo_kernel(fuse_hidden, price_ref, x_ref,
               w1_ref, b1_ref, w2_ref, b2_ref, w3_ref, b3_ref,
               w4_ref, b4_ref, out_ref):
    price_min = price_ref[0]
    price_delta = price_ref[1]

    bf16 = jnp.bfloat16
    f32 = jnp.float32

    x = x_ref[...].astype(bf16)                                  # (tm, F)

    # Fused first layer: [critic(64, zero-padded to 128) | actor(128)] = 256.
    y1 = jnp.dot(x, w1_ref[...], preferred_element_type=f32) + b1_ref[...]
    y1 = jnp.maximum(y1, 0.0).astype(bf16)                       # (tm, 256)

    if fuse_hidden:
        # Block-diagonal 256x256 hidden layers (v6e / v7x: one full-width MXU
        # pass instead of two half-width ones, no lane split / concat).
        y2 = jnp.dot(y1, w2_ref[...], preferred_element_type=f32) + b2_ref[...]
        y2 = jnp.maximum(y2, 0.0).astype(bf16)                   # (tm, 256)
        y3 = jnp.dot(y2, w3_ref[...], preferred_element_type=f32) + b3_ref[...]
        y3 = jnp.maximum(y3, 0.0).astype(bf16)                   # (tm, 256)
        heads = (jnp.dot(y3, w4_ref[...], preferred_element_type=f32)
                 + b4_ref[...])                                  # (tm, 8)
    else:
        # 128-wide path for 128x128-MXU chips (<= v5): keep critic / actor
        # hidden layers separate so we don't multiply zero off-diagonal blocks.
        h = y1[:, :128]
        a = y1[:, 128:]
        h = jnp.maximum(jnp.dot(h, w2_ref[0], preferred_element_type=f32)
                        + b2_ref[:, :128], 0.0).astype(bf16)
        a = jnp.maximum(jnp.dot(a, w2_ref[1], preferred_element_type=f32)
                        + b2_ref[:, 128:], 0.0).astype(bf16)
        h = jnp.maximum(jnp.dot(h, w3_ref[0], preferred_element_type=f32)
                        + b3_ref[:, :128], 0.0).astype(bf16)
        a = jnp.maximum(jnp.dot(a, w3_ref[1], preferred_element_type=f32)
                        + b3_ref[:, 128:], 0.0).astype(bf16)
        heads = (jnp.dot(h, w4_ref[0:128, :], preferred_element_type=f32)
                 + jnp.dot(a, w4_ref[128:256, :], preferred_element_type=f32)
                 + b4_ref[...])                                  # (tm, 8)

    # heads: col 0 = critic value, col 1 = actor logit, cols 2..7 = 0 padding.
    policy = jax.nn.sigmoid(heads * 0.001) * price_delta + price_min
    col = jax.lax.broadcasted_iota(jnp.int32, heads.shape, 1)
    out_ref[...] = jnp.where(col == 1, policy, heads)            # (tm, 8)


def _round_up(x, m):
    return (x + m - 1) // m * m


def _default_fuse_hidden():
    """Fuse hidden layers (256-wide block-diagonal) only on 256x256-MXU chips."""
    try:
        kind = jax.devices()[0].device_kind.lower()
    except Exception:
        return True
    return not any(tag in kind for tag in ("v2", "v3", "v4", "v5"))


def pack_params(params, price_min, price_max, *, fuse_hidden=None):
    """One-time packing of PPO parameters into kernel-friendly bf16 slabs."""
    if fuse_hidden is None:
        fuse_hidden = _default_fuse_hidden()
    f32, bf16 = jnp.float32, jnp.bfloat16

    def pad_to(a, shape):
        return jnp.pad(a.astype(f32), [(0, s - d) for d, s in zip(a.shape, shape)])

    F = params["cw1"].shape[0]

    # Layer 1: [critic (padded 64->128) | actor (128)] -> (F, 256)
    w1 = jnp.concatenate([pad_to(params["cw1"], (F, 128)),
                          params["aw1"].astype(f32)], axis=1).astype(bf16)
    b1 = jnp.concatenate([pad_to(params["cb1"], (1, 128)),
                          params["ab1"].astype(f32)], axis=1)            # f32

    cw2 = pad_to(params["cw2"], (128, 128))     # rows 64..127 zero
    cw3 = pad_to(params["cw3"], (128, 128))     # cols 64..127 zero
    aw2 = params["aw2"].astype(f32)
    aw3 = params["aw3"].astype(f32)
    b2 = jnp.concatenate([params["cb2"].astype(f32),
                          params["ab2"].astype(f32)], axis=1)            # (1,256)
    b3 = jnp.concatenate([pad_to(params["cb3"], (1, 128)),
                          params["ab3"].astype(f32)], axis=1)            # (1,256)

    if fuse_hidden:
        w2 = (jnp.zeros((256, 256), f32)
              .at[:128, :128].set(cw2).at[128:, 128:].set(aw2)).astype(bf16)
        w3 = (jnp.zeros((256, 256), f32)
              .at[:128, :128].set(cw3).at[128:, 128:].set(aw3)).astype(bf16)
    else:
        w2 = jnp.stack([cw2, aw2]).astype(bf16)                          # (2,128,128)
        w3 = jnp.stack([cw3, aw3]).astype(bf16)

    # Head: (256, 8); col 0 = critic value weights, col 1 = actor logit weights.
    cw4 = pad_to(params["cw4"], (128, 1))
    aw4 = params["aw4"].astype(f32)
    w4 = (jnp.zeros((256, 8), f32)
          .at[:128, 0:1].set(cw4).at[128:, 1:2].set(aw4)).astype(bf16)
    b4 = (jnp.zeros((1, 8), f32)
          .at[0, 0].set(params["cb4"][0, 0]).at[0, 1].set(params["ab4"][0, 0]))

    price = jnp.array([float(price_min), float(price_max) - float(price_min)], f32)
    return dict(fuse_hidden=bool(fuse_hidden), price=price,
                w1=w1, b1=b1, w2=w2, b2=b2, w3=w3, b3=b3, w4=w4, b4=b4)


def ppo_forward(state, packed, *, block_rows=2048):
    """state: (B, F) float32. packed: dict from pack_params. Returns (value, policy)."""
    B, F = state.shape
    fuse_hidden = packed["fuse_hidden"]

    # Batch tiling: multiple of 128, aim for >= 2 grid steps (v7x megacore),
    # capped by block_rows (amortizes per-step pipeline overhead, fits VMEM).
    half = (B + 1) // 2
    tm = min(block_rows, max(128, _round_up(half, 128)))
    B_pad = _round_up(B, tm)

    x = state.astype(jnp.float32)
    if B_pad != B:
        x = jnp.pad(x, ((0, B_pad - B), (0, 0)))

    weights = [packed["w1"], packed["b1"], packed["w2"], packed["b2"],
               packed["w3"], packed["b3"], packed["w4"], packed["b4"]]
    args = [packed["price"], x] + weights

    def resident(p):  # full-extent, constant index -> stays VMEM-resident
        zeros = (0,) * p.ndim
        return pl.BlockSpec(p.shape, lambda i: zeros)

    in_specs = ([pl.BlockSpec(memory_space=pltpu.MemorySpace.SMEM),   # price (2,)
                 pl.BlockSpec((tm, F), lambda i: (i, 0))]             # state tile
                + [resident(p) for p in weights])

    kernel = functools.partial(ppo_kernel, fuse_hidden)
    out = pl.pallas_call(
        kernel,
        grid=(B_pad // tm,),
        out_shape=jax.ShapeDtypeStruct((B_pad, 8), jnp.float32),
        in_specs=in_specs,
        out_specs=pl.BlockSpec((tm, 8), lambda i: (i, 0)),
        compiler_params=pltpu.CompilerParams(
            dimension_semantics=("parallel",),
            vmem_limit_bytes=32 * 1024 * 1024),
    )(*args)

    value = out[:B, 0:1]
    policy = out[:B, 1:2]
    return value, policy


def _xavier_uniform(key, fan_in, fan_out):
    limit = math.sqrt(6.0 / (fan_in + fan_out))
    # stored as (in, out) so the kernel does x @ W
    return jax.random.uniform(key, (fan_in, fan_out), jnp.float32, -limit, limit)


def make_params(key, num_state_features):
    F = num_state_features
    critic_dims = [(F, 64), (64, 128), (128, 64), (64, 1)]
    actor_dims = [(F, 128), (128, 128), (128, 128), (128, 1)]
    params = {}
    keys = jax.random.split(key, 16)
    # critic: xavier weights, torch-default-style uniform biases (synthetic init)
    for i, (fi, fo) in enumerate(critic_dims, start=1):
        params[f"cw{i}"] = _xavier_uniform(keys[2 * (i - 1)], fi, fo)
        bound = 1.0 / math.sqrt(fi)
        params[f"cb{i}"] = jax.random.uniform(keys[2 * (i - 1) + 1], (1, fo),
                                              jnp.float32, -bound, bound)
    # actor: init_weights -> xavier_uniform weights, bias = 0.01
    for i, (fi, fo) in enumerate(actor_dims, start=1):
        params[f"aw{i}"] = _xavier_uniform(keys[8 + i - 1], fi, fo)
        params[f"ab{i}"] = jnp.full((1, fo), 0.01, jnp.float32)
    return params


def _reference(state, params, price_min, price_max):
    x = state.astype(jnp.float32)
    h = x
    for i in range(1, 4):
        h = jnp.maximum(h @ params[f"cw{i}"] + params[f"cb{i}"], 0.0)
    value = h @ params["cw4"] + params["cb4"]
    a = x
    for i in range(1, 4):
        a = jnp.maximum(a @ params[f"aw{i}"] + params[f"ab{i}"], 0.0)
    logits = a @ params["aw4"] + params["ab4"]
    policy = jax.nn.sigmoid(logits * 0.001) * (price_max - price_min) + price_min
    return value, policy


if __name__ == "__main__":
    key = jax.random.PRNGKey(0)
    kp, ks = jax.random.split(key)

    batch = 8
    num_state_features = 32
    price_min = 10.0
    price_max = 100.0

    params = make_params(kp, num_state_features)
    packed = pack_params(params, price_min, price_max)
    state = jax.random.normal(ks, (batch, num_state_features), jnp.float32)

    value, policy = ppo_forward(state, packed)
    value = jax.block_until_ready(value)
    policy = jax.block_until_ready(policy)

    ref_value, ref_policy = _reference(state, params, price_min, price_max)
    assert value.shape == (batch, 1) and policy.shape == (batch, 1)
    # bf16 matmul operands (f32 accumulation) -> relaxed tolerances vs f32 ref.
    assert jnp.allclose(value, ref_value, atol=1e-1, rtol=1e-1)
    assert jnp.allclose(policy, ref_policy, atol=1e-2, rtol=1e-3)

    # Also exercise the multi-step batch grid + row-padding path.
    batch2 = 300
    state2 = jax.random.normal(jax.random.PRNGKey(1),
                               (batch2, num_state_features), jnp.float32)
    v2, p2 = ppo_forward(state2, packed, block_rows=128)
    v2 = jax.block_until_ready(v2)
    p2 = jax.block_until_ready(p2)
    rv2, rp2 = _reference(state2, params, price_min, price_max)
    assert v2.shape == (batch2, 1) and p2.shape == (batch2, 1)
    assert jnp.allclose(v2, rv2, atol=1e-1, rtol=1e-1)
    assert jnp.allclose(p2, rp2, atol=1e-2, rtol=1e-3)

    print("KERNEL_OK")
</pallas_src>

<mosaic_0001>
module attributes {stable_mosaic.version = 11 : i64} {
  func.func @ppo_kernel(%arg0: i32, %arg1: memref<2xf32, #tpu.memory_space<smem>>, %arg2: memref<128x32xf32, #tpu.memory_space<vmem>>, %arg3: memref<32x256xbf16, #tpu.memory_space<vmem>>, %arg4: memref<1x256xf32, #tpu.memory_space<vmem>>, %arg5: memref<256x256xbf16, #tpu.memory_space<vmem>>, %arg6: memref<1x256xf32, #tpu.memory_space<vmem>>, %arg7: memref<256x256xbf16, #tpu.memory_space<vmem>>, %arg8: memref<1x256xf32, #tpu.memory_space<vmem>>, %arg9: memref<256x8xbf16, #tpu.memory_space<vmem>>, %arg10: memref<1x8xf32, #tpu.memory_space<vmem>>, %arg11: memref<128x8xf32, #tpu.memory_space<vmem>>) attributes {dimension_semantics = [#tpu.dimension_semantics<parallel>], iteration_bounds = array<i64: 1>, scalar_prefetch = 0 : i64, scratch_operands = 0 : i64, tpu.core_type = #tpu.core_type<tc>, window_params = [{transform_indices = @transform_0, window_bounds = array<i64: 2>}, {transform_indices = @transform_1, window_bounds = array<i64: 128, 32>}, {pipeline_mode = #tpu.pipeline_mode<synchronous>, transform_indices = @transform_2, window_bounds = array<i64: 32, 256>}, {pipeline_mode = #tpu.pipeline_mode<synchronous>, transform_indices = @transform_3, window_bounds = array<i64: 1, 256>}, {pipeline_mode = #tpu.pipeline_mode<synchronous>, transform_indices = @transform_4, window_bounds = array<i64: 256, 256>}, {pipeline_mode = #tpu.pipeline_mode<synchronous>, transform_indices = @transform_5, window_bounds = array<i64: 1, 256>}, {pipeline_mode = #tpu.pipeline_mode<synchronous>, transform_indices = @transform_6, window_bounds = array<i64: 256, 256>}, {pipeline_mode = #tpu.pipeline_mode<synchronous>, transform_indices = @transform_7, window_bounds = array<i64: 1, 256>}, {pipeline_mode = #tpu.pipeline_mode<synchronous>, transform_indices = @transform_8, window_bounds = array<i64: 256, 8>}, {pipeline_mode = #tpu.pipeline_mode<synchronous>, transform_indices = @transform_9, window_bounds = array<i64: 1, 8>}, {transform_indices = @transform_10, window_bounds = array<i64: 128, 8>}]} {
    %c0 = arith.constant 0 : index
    %0 = memref.load %arg1[%c0] : memref<2xf32, #tpu.memory_space<smem>>
    %c1 = arith.constant 1 : index
    %1 = memref.load %arg1[%c1] : memref<2xf32, #tpu.memory_space<smem>>
    %c0_0 = arith.constant 0 : index
    %c0_1 = arith.constant 0 : index
    %2 = vector.load %arg2[%c0_0, %c0_1] : memref<128x32xf32, #tpu.memory_space<vmem>>, vector<128x32xf32>
    %3 = arith.truncf %2 : vector<128x32xf32> to vector<128x32xbf16>
    %c0_2 = arith.constant 0 : index
    %c0_3 = arith.constant 0 : index
    %4 = vector.load %arg3[%c0_2, %c0_3] : memref<32x256xbf16, #tpu.memory_space<vmem>>, vector<32x256xbf16>
    %cst = arith.constant dense<0.000000e+00> : vector<128x256xf32>
    %5 = tpu.matmul %3, %4, %cst {dimension_numbers = #tpu.dot_dimension_numbers<[1], [0], [0], [1], [0, 0, 1, 1], [], []>} : vector<128x32xbf16>, vector<32x256xbf16>, vector<128x256xf32> -> vector<128x256xf32>
    %c0_4 = arith.constant 0 : index
    %c0_5 = arith.constant 0 : index
    %6 = vector.load %arg4[%c0_4, %c0_5] : memref<1x256xf32, #tpu.memory_space<vmem>>, vector<1x256xf32>
    %7 = vector.broadcast %6 : vector<1x256xf32> to vector<128x256xf32>
    %8 = arith.addf %5, %7 : vector<128x256xf32>
    %cst_6 = arith.constant 0.000000e+00 : f32
    %9 = vector.broadcast %cst_6 : f32 to vector<128x256xf32>
    %10 = arith.maximumf %8, %9 : vector<128x256xf32>
    %11 = arith.truncf %10 : vector<128x256xf32> to vector<128x256xbf16>
    %c0_7 = arith.constant 0 : index
    %c0_8 = arith.constant 0 : index
    %12 = vector.load %arg5[%c0_7, %c0_8] : memref<256x256xbf16, #tpu.memory_space<vmem>>, vector<256x256xbf16>
    %cst_9 = arith.constant dense<0.000000e+00> : vector<128x256xf32>
    %13 = tpu.matmul %11, %12, %cst_9 {dimension_numbers = #tpu.dot_dimension_numbers<[1], [0], [0], [1], [0, 0, 1, 1], [], []>} : vector<128x256xbf16>, vector<256x256xbf16>, vector<128x256xf32> -> vector<128x256xf32>
    %c0_10 = arith.constant 0 : index
    %c0_11 = arith.constant 0 : index
    %14 = vector.load %arg6[%c0_10, %c0_11] : memref<1x256xf32, #tpu.memory_space<vmem>>, vector<1x256xf32>
    %15 = vector.broadcast %14 : vector<1x256xf32> to vector<128x256xf32>
    %16 = arith.addf %13, %15 : vector<128x256xf32>
    %cst_12 = arith.constant 0.000000e+00 : f32
    %17 = vector.broadcast %cst_12 : f32 to vector<128x256xf32>
    %18 = arith.maximumf %16, %17 : vector<128x256xf32>
    %19 = arith.truncf %18 : vector<128x256xf32> to vector<128x256xbf16>
    %c0_13 = arith.constant 0 : index
    %c0_14 = arith.constant 0 : index
    %20 = vector.load %arg7[%c0_13, %c0_14] : memref<256x256xbf16, #tpu.memory_space<vmem>>, vector<256x256xbf16>
    %cst_15 = arith.constant dense<0.000000e+00> : vector<128x256xf32>
    %21 = tpu.matmul %19, %20, %cst_15 {dimension_numbers = #tpu.dot_dimension_numbers<[1], [0], [0], [1], [0, 0, 1, 1], [], []>} : vector<128x256xbf16>, vector<256x256xbf16>, vector<128x256xf32> -> vector<128x256xf32>
    %c0_16 = arith.constant 0 : index
    %c0_17 = arith.constant 0 : index
    %22 = vector.load %arg8[%c0_16, %c0_17] : memref<1x256xf32, #tpu.memory_space<vmem>>, vector<1x256xf32>
    %23 = vector.broadcast %22 : vector<1x256xf32> to vector<128x256xf32>
    %24 = arith.addf %21, %23 : vector<128x256xf32>
    %cst_18 = arith.constant 0.000000e+00 : f32
    %25 = vector.broadcast %cst_18 : f32 to vector<128x256xf32>
    %26 = arith.maximumf %24, %25 : vector<128x256xf32>
    %27 = arith.truncf %26 : vector<128x256xf32> to vector<128x256xbf16>
    %c0_19 = arith.constant 0 : index
    %c0_20 = arith.constant 0 : index
    %28 = vector.load %arg9[%c0_19, %c0_20] : memref<256x8xbf16, #tpu.memory_space<vmem>>, vector<256x8xbf16>
    %cst_21 = arith.constant dense<0.000000e+00> : vector<128x8xf32>
    %29 = tpu.matmul %27, %28, %cst_21 {dimension_numbers = #tpu.dot_dimension_numbers<[1], [0], [0], [1], [0, 0, 1, 1], [], []>} : vector<128x256xbf16>, vector<256x8xbf16>, vector<128x8xf32> -> vector<128x8xf32>
    %c0_22 = arith.constant 0 : index
    %c0_23 = arith.constant 0 : index
    %30 = vector.load %arg10[%c0_22, %c0_23] : memref<1x8xf32, #tpu.memory_space<vmem>>, vector<1x8xf32>
    %31 = vector.broadcast %30 : vector<1x8xf32> to vector<128x8xf32>
    %32 = arith.addf %29, %31 : vector<128x8xf32>
    %cst_24 = arith.constant 1.000000e-03 : f32
    %33 = vector.broadcast %cst_24 : f32 to vector<128x8xf32>
    %34 = arith.mulf %32, %33 : vector<128x8xf32>
    %35 = arith.negf %34 : vector<128x8xf32>
    %36 = math.exp %35 : vector<128x8xf32>
    %cst_25 = arith.constant 1.000000e+00 : f32
    %37 = vector.broadcast %cst_25 : f32 to vector<128x8xf32>
    %38 = arith.addf %37, %36 : vector<128x8xf32>
    %39 = arith.divf %37, %38 : vector<128x8xf32>
    %40 = vector.broadcast %1 : f32 to vector<128x8xf32>
    %41 = arith.mulf %39, %40 : vector<128x8xf32>
    %42 = vector.broadcast %0 : f32 to vector<128x8xf32>
    %43 = arith.addf %41, %42 : vector<128x8xf32>
    %44 = tpu.iota {dimensions = array<i32: 1>} : vector<128x8xi32>
    %c1_i32 = arith.constant 1 : i32
    %45 = vector.broadcast %c1_i32 : i32 to vector<128x8xi32>
    %46 = arith.cmpi eq, %44, %45 : vector<128x8xi32>
    %47 = arith.select %46, %43, %32 : vector<128x8xi1>, vector<128x8xf32>
    %c0_26 = arith.constant 0 : index
    %c0_27 = arith.constant 0 : index
    %48 = vector.load %arg11[%c0_26, %c0_27] : memref<128x8xf32, #tpu.memory_space<vmem>>, vector<128x8xf32>
    tpu.vector_store %arg11[%c0_26, %c0_27], %47 {strides = array<i32>} : memref<128x8xf32, #tpu.memory_space<vmem>>, vector<128x8xf32>,
    return
  }
  func.func @transform_0(%arg0: i32) -> i32 {
    %c0_i32 = arith.constant 0 : i32
    %c0_i32_0 = arith.constant 0 : i32
    return %c0_i32 : i32
  }
  func.func @transform_1(%arg0: i32) -> (i32, i32) {
    %c0_i32 = arith.constant 0 : i32
    %c0_i32_0 = arith.constant 0 : i32
    return %arg0, %c0_i32 : i32, i32
  }
  func.func @transform_2(%arg0: i32) -> (i32, i32) {
    %c0_i32 = arith.constant 0 : i32
    %c0_i32_0 = arith.constant 0 : i32
    %c0_i32_1 = arith.constant 0 : i32
    return %c0_i32, %c0_i32_0 : i32, i32
  }
  func.func @transform_3(%arg0: i32) -> (i32, i32) {
    %c0_i32 = arith.constant 0 : i32
    %c0_i32_0 = arith.constant 0 : i32
    %c0_i32_1 = arith.constant 0 : i32
    return %c0_i32, %c0_i32_0 : i32, i32
  }
  func.func @transform_4(%arg0: i32) -> (i32, i32) {
    %c0_i32 = arith.constant 0 : i32
    %c0_i32_0 = arith.constant 0 : i32
    %c0_i32_1 = arith.constant 0 : i32
    return %c0_i32, %c0_i32_0 : i32, i32
  }
  func.func @transform_5(%arg0: i32) -> (i32, i32) {
    %c0_i32 = arith.constant 0 : i32
    %c0_i32_0 = arith.constant 0 : i32
    %c0_i32_1 = arith.constant 0 : i32
    return %c0_i32, %c0_i32_0 : i32, i32
  }
  func.func @transform_6(%arg0: i32) -> (i32, i32) {
    %c0_i32 = arith.constant 0 : i32
    %c0_i32_0 = arith.constant 0 : i32
    %c0_i32_1 = arith.constant 0 : i32
    return %c0_i32, %c0_i32_0 : i32, i32
  }
  func.func @transform_7(%arg0: i32) -> (i32, i32) {
    %c0_i32 = arith.constant 0 : i32
    %c0_i32_0 = arith.constant 0 : i32
    %c0_i32_1 = arith.constant 0 : i32
    return %c0_i32, %c0_i32_0 : i32, i32
  }
  func.func @transform_8(%arg0: i32) -> (i32, i32) {
    %c0_i32 = arith.constant 0 : i32
    %c0_i32_0 = arith.constant 0 : i32
    %c0_i32_1 = arith.constant 0 : i32
    return %c0_i32, %c0_i32_0 : i32, i32
  }
  func.func @transform_9(%arg0: i32) -> (i32, i32) {
    %c0_i32 = arith.constant 0 : i32
    %c0_i32_0 = arith.constant 0 : i32
    %c0_i32_1 = arith.constant 0 : i32
    return %c0_i32, %c0_i32_0 : i32, i32
  }
  func.func @transform_10(%arg0: i32) -> (i32, i32) {
    %c0_i32 = arith.constant 0 : i32
    %c0_i32_0 = arith.constant 0 : i32
    return %arg0, %c0_i32 : i32, i32
  }
}

</mosaic_0001>

<llo_original>
// kernel: tpu_custom_call.1
$region0: #{tpu_custom_call.1}
  #allocation0 [shape = 'u32[]', space=smem, size = 0x4, offset = 0x4, fixed_abs, tag = 'smem constant byte address 0x4 - core index']
  #allocation1 [shape = 'u32[144,128]{1,0:T(1,128)}', space=vmem, size = 0x12000, scoped, tag = 'internal scratch']
  %s0 = inlined_call_operand.vmem [shape: f32[2], index: 0, kind: input, shape index: {}]
  %s1 = inlined_call_operand.vmem [shape: f32[128,32], index: 1, kind: input, shape index: {}]
  %s2 = inlined_call_operand.vmem [shape: bf16[32,256], index: 2, kind: input, shape index: {}]
  %s3 = inlined_call_operand.vmem [shape: f32[1,256], index: 3, kind: input, shape index: {}]
  %s4 = inlined_call_operand.vmem [shape: bf16[256,256], index: 4, kind: input, shape index: {}]
  %s5 = inlined_call_operand.vmem [shape: f32[1,256], index: 5, kind: input, shape index: {}]
  %s6 = inlined_call_operand.hbm [shape: bf16[256,256], index: 6, kind: input, shape index: {}]
  %s7 = inlined_call_operand.vmem [shape: f32[1,256], index: 7, kind: input, shape index: {}]
  %s8 = inlined_call_operand.vmem [shape: bf16[256,8], index: 8, kind: input, shape index: {}]
  %s9 = inlined_call_operand.vmem [shape: f32[1,8], index: 9, kind: input, shape index: {}]
  %s10 = inlined_call_operand.vmem [shape: f32[128,8], index: 10, kind: output, shape index: {}]
  %s11 = sld [smem:[#allocation0]]
  $region58: #{tpu_custom_call.1} parent=0
    _
  %s13 = ssub.s32 1, %s11
  %s14 = scalar_select 0, %s13, %s11
  $region1: #{tpu_custom_call.1} parent=0
    #allocation2 [shape = 'u8[512]{0}', space=smem, size = 0x200, scoped, tag = 'input window, operand 0, single buffered']
    #allocation3 [shape = 's32[1]{0}', space=sflag, size = 0x4, scoped, tag = 'scoped memory for tpu_custom_call.1']
    #allocation4 [shape = 's32[1]{0}', space=sflag, size = 0x4, scoped, tag = 'scoped memory for tpu_custom_call.1']
    #allocation5 [shape = 'u8[131072]{0}', space=vmem, size = 0x20000, scoped, tag = 'input window, operand 6, single buffered']
    %15 = vsyncpa [#allocation4], 0
    %16 = vsyncpa [#allocation3], 0
    // Predicated region
    $region2: #{tpu_custom_call.1} parent=1 // pred_check
      _
    $region3: #{tpu_custom_call.1} parent=1 // pred_check_branch
      %18 = sbr.rel (0) target = $region5
    $region4: #{tpu_custom_call.1} parent=1 // pred_region
      %s20 = ssub.s32 16, 16
      %21 = vsyncadd [#allocation4], %s20
      %s23 = sshll.u32 %s0, 4
      %s24 = int_to_ptr.vmem [resolvable:$true] %s23
      %26 = dma.vmem_to_smem %s24, 16, [#allocation2], [#allocation4]
    $region5: #{tpu_custom_call.1} parent=1 // pred_fallthru
      _
    // Predicated region
    $region6: #{tpu_custom_call.1} parent=1 // pred_check
      _
    $region7: #{tpu_custom_call.1} parent=1 // pred_check_branch
      %28 = sbr.rel (0) target = $region9
    $region8: #{tpu_custom_call.1} parent=1 // pred_region
      _
    $region9: #{tpu_custom_call.1} parent=1 // pred_fallthru
      _
    // Predicated region
    $region10: #{tpu_custom_call.1} parent=1 // pred_check
      _
    $region11: #{tpu_custom_call.1} parent=1 // pred_check_branch
      %30 = sbr.rel (0) target = $region13
    $region12: #{tpu_custom_call.1} parent=1 // pred_region
      _
    $region13: #{tpu_custom_call.1} parent=1 // pred_fallthru
      _
    // Predicated region
    $region14: #{tpu_custom_call.1} parent=1 // pred_check
      _
    $region15: #{tpu_custom_call.1} parent=1 // pred_check_branch
      %32 = sbr.rel (0) target = $region17
    $region16: #{tpu_custom_call.1} parent=1 // pred_region
      _
    $region17: #{tpu_custom_call.1} parent=1 // pred_fallthru
      _
    // Predicated region
    $region18: #{tpu_custom_call.1} parent=1 // pred_check
      _
    $region19: #{tpu_custom_call.1} parent=1 // pred_check_branch
      %34 = sbr.rel (0) target = $region21
    $region20: #{tpu_custom_call.1} parent=1 // pred_region
      _
    $region21: #{tpu_custom_call.1} parent=1 // pred_fallthru
      _
    // Predicated region
    $region22: #{tpu_custom_call.1} parent=1 // pred_check
      _
    $region23: #{tpu_custom_call.1} parent=1 // pred_check_branch
      %36 = sbr.rel (0) target = $region25
    $region24: #{tpu_custom_call.1} parent=1 // pred_region
      _
    $region25: #{tpu_custom_call.1} parent=1 // pred_fallthru
      _
    // Predicated region
    $region26: #{tpu_custom_call.1} parent=1 // pred_check
      _
    $region27: #{tpu_custom_call.1} parent=1 // pred_check_branch
      %38 = sbr.rel (0) target = $region29
    $region28: #{tpu_custom_call.1} parent=1 // pred_region
      %s40 = ssub.s32 4096, 4096
      %41 = vsyncadd [#allocation3], %s40
      %s42 = sshll.u32 [#allocation5], 4
      %s43 = int_to_ptr.vmem [resolvable:$true] %s42
      %48 = dma.hbm_to_vmem [thread:$0]  %s6, 4096, %s43, [#allocation3], 128, 128, 8
    $region29: #{tpu_custom_call.1} parent=1 // pred_fallthru
      _
    // Predicated region
    $region30: #{tpu_custom_call.1} parent=1 // pred_check
      _
    $region31: #{tpu_custom_call.1} parent=1 // pred_check_branch
      %50 = sbr.rel (0) target = $region33
    $region32: #{tpu_custom_call.1} parent=1 // pred_region
      _
    $region33: #{tpu_custom_call.1} parent=1 // pred_fallthru
      _
    // Predicated region
    $region34: #{tpu_custom_call.1} parent=1 // pred_check
      _
    $region35: #{tpu_custom_call.1} parent=1 // pred_check_branch
      %52 = sbr.rel (0) target = $region37
    $region36: #{tpu_custom_call.1} parent=1 // pred_region
      _
    $region37: #{tpu_custom_call.1} parent=1 // pred_fallthru
      _
    // Predicated region
    $region38: #{tpu_custom_call.1} parent=1 // pred_check
      _
    $region39: #{tpu_custom_call.1} parent=1 // pred_check_branch
      %54 = sbr.rel (0) target = $region41
    $region40: #{tpu_custom_call.1} parent=1 // pred_region
      _
    $region41: #{tpu_custom_call.1} parent=1 // pred_fallthru
      _
    // Predicated region
    $region42: #{tpu_custom_call.1} parent=1 // pred_check
      _
    $region43: #{tpu_custom_call.1} parent=1 // pred_check_branch
      %56 = sbr.rel (0) target = $region45
    $region44: #{tpu_custom_call.1} parent=1 // pred_region
      %57 = dma.done [#allocation4], 16
    $region45: #{tpu_custom_call.1} parent=1 // pred_fallthru
      _
    // Predicated region
    $region46: #{tpu_custom_call.1} parent=1 // pred_check
      _
    $region47: #{tpu_custom_call.1} parent=1 // pred_check_branch
      %59 = sbr.rel (0) target = $region49
    $region48: #{tpu_custom_call.1} parent=1 // pred_region
      %60 = dma.done [#allocation3], 4096
    $region49: #{tpu_custom_call.1} parent=1 // pred_fallthru
      _
    %61 = sfence
    %s63 = sld [smem:[#allocation2]]
    %s64 = sld [smem:[#allocation2 + $0x1]]
    %v65 = vld [vmem:[%s1] sm:$0xff]
    %v66 = vld [vmem:[%s1 + $0x8] sm:$0xff]
    %v67 = vld [vmem:[%s1 + $0x10] sm:$0xff]
    %v68 = vld [vmem:[%s1 + $0x18] sm:$0xff]
    %v69 = vld [vmem:[%s1 + $0x20] sm:$0xff]
    %v70 = vld [vmem:[%s1 + $0x28] sm:$0xff]
    %v71 = vld [vmem:[%s1 + $0x30] sm:$0xff]
    %v72 = vld [vmem:[%s1 + $0x38] sm:$0xff]
    %v73 = vld [vmem:[%s1 + $0x40] sm:$0xff]
    %v74 = vld [vmem:[%s1 + $0x48] sm:$0xff]
    %v75 = vld [vmem:[%s1 + $0x50] sm:$0xff]
    %v76 = vld [vmem:[%s1 + $0x58] sm:$0xff]
    %v77 = vld [vmem:[%s1 + $0x60] sm:$0xff]
    %v78 = vld [vmem:[%s1 + $0x68] sm:$0xff]
    %v79 = vld [vmem:[%s1 + $0x70] sm:$0xff]
    %v80 = vld [vmem:[%s1 + $0x78] sm:$0xff]
    %v81 = vpack.c.bf16 %v66, %v65
    %v82 = vpack.c.bf16 %v68, %v67
    %v83 = vpack.c.bf16 %v70, %v69
    %v84 = vpack.c.bf16 %v72, %v71
    %v85 = vpack.c.bf16 %v74, %v73
    %v86 = vpack.c.bf16 %v76, %v75
    %v87 = vpack.c.bf16 %v78, %v77
    %v88 = vpack.c.bf16 %v80, %v79
    %v89 = vld [vmem:[%s2] sm:$0xff]
    %v90 = vld [vmem:[%s2 + $0x8] sm:$0xff]
    %v91 = vld [vmem:[%s2 + $0x10] sm:$0xff]
    %v92 = vld [vmem:[%s2 + $0x18] sm:$0xff]
    %v93 = vld [vmem:[%s3] sm:$0x3]
    %v95 = vlaneseq
    %v96 = vshrl.u32 %v95, 7
    %v97 = vsub.s32 0, %v96
    %v98 = vrot.slane %v93, %v97
    %v99 = vlaneseq
    %v100 = vshrl.u32 %v99, 7
    %v101 = vsub.s32 1, %v100
    %v102 = vrot.slane %v93, %v101
    %v109 = vunpack.c.l.b16 %v89
    %v110 = vunpack.c.h.b16 %v89
    %v111 = vunpack.c.l.b16 %v90
    %v112 = vunpack.c.h.b16 %v90
    %v113 = vunpack.c.l.b16 %v91
    %v114 = vunpack.c.h.b16 %v91
    %v115 = vunpack.c.l.b16 %v92
    %v116 = vunpack.c.h.b16 %v92
    %v117 = vpack.c.b16 %v111, %v109
    %v118 = vpack.c.b16 %v112, %v110
    %v119 = vpack.c.b16 %v115, %v113
    %v120 = vpack.c.b16 %v116, %v114
    %vm125 = vcmask 261120
    %v127 = vsel %vm125, %v81, 0
    %v130 = vsel %vm125, %v82, 0
    %v133 = vsel %vm125, %v83, 0
    %v136 = vsel %vm125, %v84, 0
    %v139 = vsel %vm125, %v85, 0
    %v142 = vsel %vm125, %v86, 0
    %v145 = vsel %vm125, %v87, 0
    %v148 = vsel %vm125, %v88, 0
    %150 = vmatprep.subr.bf16.mxu0 %v118
    %151 = vmatpush1.bf16.msra.mxu0 %v117
    %152 = vmatprep.subr.bf16.mxu0 %v120
    %153 = vmatpush1.bf16.msra.mxu0 %v119
    %154 = vmatprep.subr.bf16.mxu0 0
    %155 = vmatpush1.bf16.msra.mxu0 0
    %156 = vmatprep.subr.bf16.mxu0 0
    %157 = vmatpush1.bf16.msra.mxu0 0
    %158 = vmatprep.subr.bf16.mxu0 0
    %159 = vmatpush1.bf16.msra.mxu0 0
    %160 = vmatprep.subr.bf16.mxu0 0
    %161 = vmatpush1.bf16.msra.mxu0 0
    %162 = vmatprep.subr.bf16.mxu0 0
    %163 = vmatpush1.bf16.msra.mxu0 0
    %164 = vmatprep.subr.bf16.mxu0 0
    %165 = vmatpush1.bf16.msra.mxu0 0
    %166 = vmatprep.subr.bf16.mxu0 0
    %167 = vmatpush1.bf16.msra.mxu0 0
    %168 = vmatprep.subr.bf16.mxu0 0
    %169 = vmatpush1.bf16.msra.mxu0 0
    %170 = vmatprep.subr.bf16.mxu0 0
    %171 = vmatpush1.bf16.msra.mxu0 0
    %172 = vmatprep.subr.bf16.mxu0 0
    %173 = vmatpush1.bf16.msra.mxu0 0
    %174 = vmatprep.subr.bf16.mxu0 0
    %175 = vmatpush1.bf16.msra.mxu0 0
    %176 = vmatprep.subr.bf16.mxu0 0
    %177 = vmatpush1.bf16.msra.mxu0 0
    %178 = vmatprep.subr.bf16.mxu0 0
    %179 = vmatpush1.bf16.msra.mxu0 0
    %180 = vmatprep.subr.bf16.mxu0 0
    %181 = vmatpush1.bf16.msra.mxu0 0
    %182 = vmatprep.mubr.bf16.mxu0 0
    %183 = vmatmul.mubr.bf16.gmra.mrb[0].mxu0 %v127
    %v184 = vpop.f32.mrb[0].mxu0
    %v185 = vadd.f32 %v98, %v184
    %v186 = vpop.f32.mrb[0].mxu0
    %v187 = vadd.f32 %v102, %v186
    %v188 = vpop.f32.mrb[0].mxu0
    %v189 = vadd.f32 %v98, %v188
    %v190 = vpop.f32.mrb[0].mxu0
    %v191 = vadd.f32 %v102, %v190
    %192 = vmatprep.mubr.bf16.mxu0 0
    %193 = vmatmul.mubr.bf16.gmra.mrb[0].mxu0 %v130
    %v194 = vpop.f32.mrb[0].mxu0
    %v195 = vadd.f32 %v98, %v194
    %v196 = vpop.f32.mrb[0].mxu0
    %v197 = vadd.f32 %v102, %v196
    %v198 = vpop.f32.mrb[0].mxu0
    %v199 = vadd.f32 %v98, %v198
    %v200 = vpop.f32.mrb[0].mxu0
    %v201 = vadd.f32 %v102, %v200
    %202 = vmatprep.mubr.bf16.mxu0 0
    %203 = vmatmul.mubr.bf16.gmra.mrb[0].mxu0 %v133
    %v204 = vpop.f32.mrb[0].mxu0
    %v205 = vadd.f32 %v98, %v204
    %v206 = vpop.f32.mrb[0].mxu0
    %v207 = vadd.f32 %v102, %v206
    %v208 = vpop.f32.mrb[0].mxu0
    %v209 = vadd.f32 %v98, %v208
    %v210 = vpop.f32.mrb[0].mxu0
    %v211 = vadd.f32 %v102, %v210
    %212 = vmatprep.mubr.bf16.mxu0 0
    %213 = vmatmul.mubr.bf16.gmra.mrb[0].mxu0 %v136
    %v214 = vpop.f32.mrb[0].mxu0
    %v215 = vadd.f32 %v98, %v214
    %v216 = vpop.f32.mrb[0].mxu0
    %v217 = vadd.f32 %v102, %v216
    %v218 = vpop.f32.mrb[0].mxu0
    %v219 = vadd.f32 %v98, %v218
    %v220 = vpop.f32.mrb[0].mxu0
    %v221 = vadd.f32 %v102, %v220
    %222 = vmatprep.mubr.bf16.mxu0 0
    %223 = vmatmul.mubr.bf16.gmra.mrb[0].mxu0 %v139
    %v224 = vpop.f32.mrb[0].mxu0
    %v225 = vadd.f32 %v98, %v224
    %v226 = vpop.f32.mrb[0].mxu0
    %v227 = vadd.f32 %v102, %v226
    %v228 = vpop.f32.mrb[0].mxu0
    %v229 = vadd.f32 %v98, %v228
    %v230 = vpop.f32.mrb[0].mxu0
    %v231 = vadd.f32 %v102, %v230
    %232 = vmatprep.mubr.bf16.mxu0 0
    %233 = vmatmul.mubr.bf16.gmra.mrb[0].mxu0 %v142
    %v234 = vpop.f32.mrb[0].mxu0
    %v235 = vadd.f32 %v98, %v234
    %v236 = vpop.f32.mrb[0].mxu0
    %v237 = vadd.f32 %v102, %v236
    %v238 = vpop.f32.mrb[0].mxu0
    %v239 = vadd.f32 %v98, %v238
    %v240 = vpop.f32.mrb[0].mxu0
    %v241 = vadd.f32 %v102, %v240
    %242 = vmatprep.mubr.bf16.mxu0 0
    %243 = vmatmul.mubr.bf16.gmra.mrb[0].mxu0 %v145
    %v244 = vpop.f32.mrb[0].mxu0
    %v245 = vadd.f32 %v98, %v244
    %v246 = vpop.f32.mrb[0].mxu0
    %v247 = vadd.f32 %v102, %v246
    %v248 = vpop.f32.mrb[0].mxu0
    %v249 = vadd.f32 %v98, %v248
    %v250 = vpop.f32.mrb[0].mxu0
    %v251 = vadd.f32 %v102, %v250
    %252 = vmatprep.mubr.bf16.mxu0 0
    %253 = vmatmul.mubr.bf16.gmra.mrb[0].mxu0 %v148
    %v254 = vpop.f32.mrb[0].mxu0
    %v255 = vadd.f32 %v98, %v254
    %v256 = vpop.f32.mrb[0].mxu0
    %v257 = vadd.f32 %v102, %v256
    %v258 = vpop.f32.mrb[0].mxu0
    %v259 = vadd.f32 %v98, %v258
    %v260 = vpop.f32.mrb[0].mxu0
    %v261 = vadd.f32 %v102, %v260
    %262 = vdwg.mxu0
    %v263 = vmax.f32 %v185, 0.0
    %v264 = vmax.f32 %v187, 0.0
    %v265 = vmax.f32 %v189, 0.0
    %v266 = vmax.f32 %v191, 0.0
    %v267 = vmax.f32 %v195, 0.0
    %v268 = vmax.f32 %v197, 0.0
    %v269 = vmax.f32 %v199, 0.0
    %v270 = vmax.f32 %v201, 0.0
    %v271 = vmax.f32 %v205, 0.0
    %v272 = vmax.f32 %v207, 0.0
    %v273 = vmax.f32 %v209, 0.0
    %v274 = vmax.f32 %v211, 0.0
    %v275 = vmax.f32 %v215, 0.0
    %v276 = vmax.f32 %v217, 0.0
    %v277 = vmax.f32 %v219, 0.0
    %v278 = vmax.f32 %v221, 0.0
    %v279 = vmax.f32 %v225, 0.0
    %v280 = vmax.f32 %v227, 0.0
    %v281 = vmax.f32 %v229, 0.0
    %v282 = vmax.f32 %v231, 0.0
    %v283 = vmax.f32 %v235, 0.0
    %v284 = vmax.f32 %v237, 0.0
    %v285 = vmax.f32 %v239, 0.0
    %v286 = vmax.f32 %v241, 0.0
    %v287 = vmax.f32 %v245, 0.0
    %v288 = vmax.f32 %v247, 0.0
    %v289 = vmax.f32 %v249, 0.0
    %v290 = vmax.f32 %v251, 0.0
    %v291 = vmax.f32 %v255, 0.0
    %v292 = vmax.f32 %v257, 0.0
    %v293 = vmax.f32 %v259, 0.0
    %v294 = vmax.f32 %v261, 0.0
    %v295 = vpack.c.bf16 %v265, %v263
    %v296 = vpack.c.bf16 %v266, %v264
    %v297 = vpack.c.bf16 %v269, %v267
    %v298 = vpack.c.bf16 %v270, %v268
    %v299 = vpack.c.bf16 %v273, %v271
    %v300 = vpack.c.bf16 %v274, %v272
    %v301 = vpack.c.bf16 %v277, %v275
    %v302 = vpack.c.bf16 %v278, %v276
    %v303 = vpack.c.bf16 %v281, %v279
    %v304 = vpack.c.bf16 %v282, %v280
    %v305 = vpack.c.bf16 %v285, %v283
    %v306 = vpack.c.bf16 %v286, %v284
    %v307 = vpack.c.bf16 %v289, %v287
    %v308 = vpack.c.bf16 %v290, %v288
    %v309 = vpack.c.bf16 %v293, %v291
    %v310 = vpack.c.bf16 %v294, %v292
    %v311 = vld [vmem:[%s4] sm:$0xff]
    %v312 = vld [vmem:[%s4 + $0x8] sm:$0xff]
    %v313 = vld [vmem:[%s4 + $0x10] sm:$0xff]
    %v314 = vld [vmem:[%s4 + $0x18] sm:$0xff]
    %v315 = vld [vmem:[%s4 + $0x20] sm:$0xff]
    %v316 = vld [vmem:[%s4 + $0x28] sm:$0xff]
    %v317 = vld [vmem:[%s4 + $0x30] sm:$0xff]
    %v318 = vld [vmem:[%s4 + $0x38] sm:$0xff]
    %v319 = vld [vmem:[%s4 + $0x40] sm:$0xff]
    %v320 = vld [vmem:[%s4 + $0x48] sm:$0xff]
    %v321 = vld [vmem:[%s4 + $0x50] sm:$0xff]
    %v322 = vld [vmem:[%s4 + $0x58] sm:$0xff]
    %v323 = vld [vmem:[%s4 + $0x60] sm:$0xff]
    %v324 = vld [vmem:[%s4 + $0x68] sm:$0xff]
    %v325 = vld [vmem:[%s4 + $0x70] sm:$0xff]
    %v326 = vld [vmem:[%s4 + $0x78] sm:$0xff]
    %v327 = vld [vmem:[%s4 + $0x80] sm:$0xff]
    %v328 = vld [vmem:[%s4 + $0x88] sm:$0xff]
    %v329 = vld [vmem:[%s4 + $0x90] sm:$0xff]
    %v330 = vld [vmem:[%s4 + $0x98] sm:$0xff]
    %v331 = vld [vmem:[%s4 + $0xa0] sm:$0xff]
    %v332 = vld [vmem:[%s4 + $0xa8] sm:$0xff]
    %v333 = vld [vmem:[%s4 + $0xb0] sm:$0xff]
    %v334 = vld [vmem:[%s4 + $0xb8] sm:$0xff]
    %v335 = vld [vmem:[%s4 + $0xc0] sm:$0xff]
    %v336 = vld [vmem:[%s4 + $0xc8] sm:$0xff]
    %v337 = vld [vmem:[%s4 + $0xd0] sm:$0xff]
    %v338 = vld [vmem:[%s4 + $0xd8] sm:$0xff]
    %v339 = vld [vmem:[%s4 + $0xe0] sm:$0xff]
    %v340 = vld [vmem:[%s4 + $0xe8] sm:$0xff]
    %v341 = vld [vmem:[%s4 + $0xf0] sm:$0xff]
    %v342 = vld [vmem:[%s4 + $0xf8] sm:$0xff]
    %v343 = vld [vmem:[%s5] sm:$0x3]
    %v345 = vlaneseq
    %v346 = vshrl.u32 %v345, 7
    %v347 = vsub.s32 0, %v346
    %v348 = vrot.slane %v343, %v347
    %v349 = vlaneseq
    %v350 = vshrl.u32 %v349, 7
    %v351 = vsub.s32 1, %v350
    %v352 = vrot.slane %v343, %v351
    %v387 = vunpack.c.l.b16 %v311
    %v388 = vunpack.c.h.b16 %v311
    %v389 = vunpack.c.l.b16 %v312
    %v390 = vunpack.c.h.b16 %v312
    %v391 = vunpack.c.l.b16 %v313
    %v392 = vunpack.c.h.b16 %v313
    %v393 = vunpack.c.l.b16 %v314
    %v394 = vunpack.c.h.b16 %v314
    %v395 = vunpack.c.l.b16 %v315
    %v396 = vunpack.c.h.b16 %v315
    %v397 = vunpack.c.l.b16 %v316
    %v398 = vunpack.c.h.b16 %v316
    %v399 = vunpack.c.l.b16 %v317
    %v400 = vunpack.c.h.b16 %v317
    %v401 = vunpack.c.l.b16 %v318
    %v402 = vunpack.c.h.b16 %v318
    %v403 = vunpack.c.l.b16 %v319
    %v404 = vunpack.c.h.b16 %v319
    %v405 = vunpack.c.l.b16 %v320
    %v406 = vunpack.c.h.b16 %v320
    %v407 = vunpack.c.l.b16 %v321
    %v408 = vunpack.c.h.b16 %v321
    %v409 = vunpack.c.l.b16 %v322
    %v410 = vunpack.c.h.b16 %v322
    %v411 = vunpack.c.l.b16 %v323
    %v412 = vunpack.c.h.b16 %v323
    %v413 = vunpack.c.l.b16 %v324
    %v414 = vunpack.c.h.b16 %v324
    %v415 = vunpack.c.l.b16 %v325
    %v416 = vunpack.c.h.b16 %v325
    %v417 = vunpack.c.l.b16 %v326
    %v418 = vunpack.c.h.b16 %v326
    %v419 = vunpack.c.l.b16 %v327
    %v420 = vunpack.c.h.b16 %v327
    %v421 = vunpack.c.l.b16 %v328
    %v422 = vunpack.c.h.b16 %v328
    %v423 = vunpack.c.l.b16 %v329
    %v424 = vunpack.c.h.b16 %v329
    %v425 = vunpack.c.l.b16 %v330
    %v426 = vunpack.c.h.b16 %v330
    %v427 = vunpack.c.l.b16 %v331
    %v428 = vunpack.c.h.b16 %v331
    %v429 = vunpack.c.l.b16 %v332
    %v430 = vunpack.c.h.b16 %v332
    %v431 = vunpack.c.l.b16 %v333
    %v432 = vunpack.c.h.b16 %v333
    %v433 = vunpack.c.l.b16 %v334
    %v434 = vunpack.c.h.b16 %v334
    %v435 = vunpack.c.l.b16 %v335
    %v436 = vunpack.c.h.b16 %v335
    %v437 = vunpack.c.l.b16 %v336
    %v438 = vunpack.c.h.b16 %v336
    %v439 = vunpack.c.l.b16 %v337
    %v440 = vunpack.c.h.b16 %v337
    %v441 = vunpack.c.l.b16 %v338
    %v442 = vunpack.c.h.b16 %v338
    %v443 = vunpack.c.l.b16 %v339
    %v444 = vunpack.c.h.b16 %v339
    %v445 = vunpack.c.l.b16 %v340
    %v446 = vunpack.c.h.b16 %v340
    %v447 = vunpack.c.l.b16 %v341
    %v448 = vunpack.c.h.b16 %v341
    %v449 = vunpack.c.l.b16 %v342
    %v450 = vunpack.c.h.b16 %v342
    %v451 = vpack.c.b16 %v389, %v387
    %v452 = vpack.c.b16 %v390, %v388
    %v453 = vpack.c.b16 %v393, %v391
    %v454 = vpack.c.b16 %v394, %v392
    %v455 = vpack.c.b16 %v397, %v395
    %v456 = vpack.c.b16 %v398, %v396
    %v457 = vpack.c.b16 %v401, %v399
    %v458 = vpack.c.b16 %v402, %v400
    %v459 = vpack.c.b16 %v405, %v403
    %v460 = vpack.c.b16 %v406, %v404
    %v461 = vpack.c.b16 %v409, %v407
    %v462 = vpack.c.b16 %v410, %v408
    %v463 = vpack.c.b16 %v413, %v411
    %v464 = vpack.c.b16 %v414, %v412
    %v465 = vpack.c.b16 %v417, %v415
    %v466 = vpack.c.b16 %v418, %v416
    %v467 = vpack.c.b16 %v421, %v419
    %v468 = vpack.c.b16 %v422, %v420
    %v469 = vpack.c.b16 %v425, %v423
    %v470 = vpack.c.b16 %v426, %v424
    %v471 = vpack.c.b16 %v429, %v427
    %v472 = vpack.c.b16 %v430, %v428
    %v473 = vpack.c.b16 %v433, %v431
    %v474 = vpack.c.b16 %v434, %v432
    %v475 = vpack.c.b16 %v437, %v435
    %v476 = vpack.c.b16 %v438, %v436
    %v477 = vpack.c.b16 %v441, %v439
    %v478 = vpack.c.b16 %v442, %v440
    %v479 = vpack.c.b16 %v445, %v443
    %v480 = vpack.c.b16 %v446, %v444
    %v481 = vpack.c.b16 %v449, %v447
    %v482 = vpack.c.b16 %v450, %v448
    %515 = vmatprep.subr.bf16.mxu0 %v452
    %516 = vmatpush1.bf16.msra.mxu0 %v451
    %517 = vmatprep.subr.bf16.mxu0 %v454
    %518 = vmatpush1.bf16.msra.mxu0 %v453
    %519 = vmatprep.subr.bf16.mxu0 %v456
    %520 = vmatpush1.bf16.msra.mxu0 %v455
    %521 = vmatprep.subr.bf16.mxu0 %v458
    %522 = vmatpush1.bf16.msra.mxu0 %v457
    %523 = vmatprep.subr.bf16.mxu0 %v460
    %524 = vmatpush1.bf16.msra.mxu0 %v459
    %525 = vmatprep.subr.bf16.mxu0 %v462
    %526 = vmatpush1.bf16.msra.mxu0 %v461
    %527 = vmatprep.subr.bf16.mxu0 %v464
    %528 = vmatpush1.bf16.msra.mxu0 %v463
    %529 = vmatprep.subr.bf16.mxu0 %v466
    %530 = vmatpush1.bf16.msra.mxu0 %v465
    %531 = vmatprep.subr.bf16.mxu0 %v468
    %532 = vmatpush1.bf16.msra.mxu0 %v467
    %533 = vmatprep.subr.bf16.mxu0 %v470
    %534 = vmatpush1.bf16.msra.mxu0 %v469
    %535 = vmatprep.subr.bf16.mxu0 %v472
    %536 = vmatpush1.bf16.msra.mxu0 %v471
    %537 = vmatprep.subr.bf16.mxu0 %v474
    %538 = vmatpush1.bf16.msra.mxu0 %v473
    %539 = vmatprep.subr.bf16.mxu0 %v476
    %540 = vmatpush1.bf16.msra.mxu0 %v475
    %541 = vmatprep.subr.bf16.mxu0 %v478
    %542 = vmatpush1.bf16.msra.mxu0 %v477
    %543 = vmatprep.subr.bf16.mxu0 %v480
    %544 = vmatpush1.bf16.msra.mxu0 %v479
    %545 = vmatprep.subr.bf16.mxu0 %v482
    %546 = vmatpush1.bf16.msra.mxu0 %v481
    %547 = vmatprep.mubr.bf16.mxu0 %v296
    %548 = vmatmul.mubr.bf16.gmra.mrb[0].mxu0 %v295
    %v549 = vpop.f32.mrb[0].mxu0
    %v550 = vadd.f32 %v348, %v549
    %v551 = vpop.f32.mrb[0].mxu0
    %v552 = vadd.f32 %v352, %v551
    %v553 = vpop.f32.mrb[0].mxu0
    %v554 = vadd.f32 %v348, %v553
    %v555 = vpop.f32.mrb[0].mxu0
    %v556 = vadd.f32 %v352, %v555
    %557 = vmatprep.mubr.bf16.mxu0 %v298
    %558 = vmatmul.mubr.bf16.gmra.mrb[0].mxu0 %v297
    %v559 = vpop.f32.mrb[0].mxu0
    %v560 = vadd.f32 %v348, %v559
    %v561 = vpop.f32.mrb[0].mxu0
    %v562 = vadd.f32 %v352, %v561
    %v563 = vpop.f32.mrb[0].mxu0
    %v564 = vadd.f32 %v348, %v563
    %v565 = vpop.f32.mrb[0].mxu0
    %v566 = vadd.f32 %v352, %v565
    %567 = vmatprep.mubr.bf16.mxu0 %v300
    %568 = vmatmul.mubr.bf16.gmra.mrb[0].mxu0 %v299
    %v569 = vpop.f32.mrb[0].mxu0
    %v570 = vadd.f32 %v348, %v569
    %v571 = vpop.f32.mrb[0].mxu0
    %v572 = vadd.f32 %v352, %v571
    %v573 = vpop.f32.mrb[0].mxu0
    %v574 = vadd.f32 %v348, %v573
    %v575 = vpop.f32.mrb[0].mxu0
    %v576 = vadd.f32 %v352, %v575
    %577 = vmatprep.mubr.bf16.mxu0 %v302
    %578 = vmatmul.mubr.bf16.gmra.mrb[0].mxu0 %v301
    %v579 = vpop.f32.mrb[0].mxu0
    %v580 = vadd.f32 %v348, %v579
    %v581 = vpop.f32.mrb[0].mxu0
    %v582 = vadd.f32 %v352, %v581
    %v583 = vpop.f32.mrb[0].mxu0
    %v584 = vadd.f32 %v348, %v583
    %v585 = vpop.f32.mrb[0].mxu0
    %v586 = vadd.f32 %v352, %v585
    %587 = vmatprep.mubr.bf16.mxu0 %v304
    %588 = vmatmul.mubr.bf16.gmra.mrb[0].mxu0 %v303
    %v589 = vpop.f32.mrb[0].mxu0
    %v590 = vadd.f32 %v348, %v589
    %v591 = vpop.f32.mrb[0].mxu0
    %v592 = vadd.f32 %v352, %v591
    %v593 = vpop.f32.mrb[0].mxu0
    %v594 = vadd.f32 %v348, %v593
    %v595 = vpop.f32.mrb[0].mxu0
    %v596 = vadd.f32 %v352, %v595
    %597 = vmatprep.mubr.bf16.mxu0 %v306
    %598 = vmatmul.mubr.bf16.gmra.mrb[0].mxu0 %v305
    %v599 = vpop.f32.mrb[0].mxu0
    %v600 = vadd.f32 %v348, %v599
    %v601 = vpop.f32.mrb[0].mxu0
    %v602 = vadd.f32 %v352, %v601
    %v603 = vpop.f32.mrb[0].mxu0
    %v604 = vadd.f32 %v348, %v603
    %v605 = vpop.f32.mrb[0].mxu0
    %v606 = vadd.f32 %v352, %v605
    %607 = vmatprep.mubr.bf16.mxu0 %v308
    %608 = vmatmul.mubr.bf16.gmra.mrb[0].mxu0 %v307
    %v609 = vpop.f32.mrb[0].mxu0
    %v610 = vadd.f32 %v348, %v609
    %v611 = vpop.f32.mrb[0].mxu0
    %v612 = vadd.f32 %v352, %v611
    %v613 = vpop.f32.mrb[0].mxu0
    %v614 = vadd.f32 %v348, %v613
    %v615 = vpop.f32.mrb[0].mxu0
    %v616 = vadd.f32 %v352, %v615
    %617 = vmatprep.mubr.bf16.mxu0 %v310
    %618 = vmatmul.mubr.bf16.gmra.mrb[0].mxu0 %v309
    %v619 = vpop.f32.mrb[0].mxu0
    %v620 = vadd.f32 %v348, %v619
    %v621 = vpop.f32.mrb[0].mxu0
    %v622 = vadd.f32 %v352, %v621
    %v623 = vpop.f32.mrb[0].mxu0
    %v624 = vadd.f32 %v348, %v623
    %v625 = vpop.f32.mrb[0].mxu0
    %v626 = vadd.f32 %v352, %v625
    %627 = vdwg.mxu0
    %v628 = vmax.f32 %v550, 0.0
    %v629 = vmax.f32 %v552, 0.0
    %v630 = vmax.f32 %v554, 0.0
    %v631 = vmax.f32 %v556, 0.0
    %v632 = vmax.f32 %v560, 0.0
    %v633 = vmax.f32 %v562, 0.0
    %v634 = vmax.f32 %v564, 0.0
    %v635 = vmax.f32 %v566, 0.0
    %v636 = vmax.f32 %v570, 0.0
    %v637 = vmax.f32 %v572, 0.0
    %v638 = vmax.f32 %v574, 0.0
    %v639 = vmax.f32 %v576, 0.0
    %v640 = vmax.f32 %v580, 0.0
    %v641 = vmax.f32 %v582, 0.0
    %v642 = vmax.f32 %v584, 0.0
    %v643 = vmax.f32 %v586, 0.0
    %v644 = vmax.f32 %v590, 0.0
    %v645 = vmax.f32 %v592, 0.0
    %v646 = vmax.f32 %v594, 0.0
    %v647 = vmax.f32 %v596, 0.0
    %v648 = vmax.f32 %v600, 0.0
    %v649 = vmax.f32 %v602, 0.0
    %v650 = vmax.f32 %v604, 0.0
    %v651 = vmax.f32 %v606, 0.0
    %v652 = vmax.f32 %v610, 0.0
    %v653 = vmax.f32 %v612, 0.0
    %v654 = vmax.f32 %v614, 0.0
    %v655 = vmax.f32 %v616, 0.0
    %v656 = vmax.f32 %v620, 0.0
    %v657 = vmax.f32 %v622, 0.0
    %v658 = vmax.f32 %v624, 0.0
    %v659 = vmax.f32 %v626, 0.0
    %v660 = vpack.c.bf16 %v630, %v628
    %v661 = vpack.c.bf16 %v631, %v629
    %v662 = vpack.c.bf16 %v634, %v632
    %v663 = vpack.c.bf16 %v635, %v633
    %v664 = vpack.c.bf16 %v638, %v636
    %v665 = vpack.c.bf16 %v639, %v637
    %v666 = vpack.c.bf16 %v642, %v640
    %v667 = vpack.c.bf16 %v643, %v641
    %v668 = vpack.c.bf16 %v646, %v644
    %v669 = vpack.c.bf16 %v647, %v645
    %v670 = vpack.c.bf16 %v650, %v648
    %v671 = vpack.c.bf16 %v651, %v649
    %v672 = vpack.c.bf16 %v654, %v652
    %v673 = vpack.c.bf16 %v655, %v653
    %v674 = vpack.c.bf16 %v658, %v656
    %v675 = vpack.c.bf16 %v659, %v657
    %v676 = vld [vmem:[#allocation5] sm:$0xff]
    %v677 = vld [vmem:[#allocation5 + $0x8] sm:$0xff]
    %v678 = vld [vmem:[#allocation5 + $0x10] sm:$0xff]
    %v679 = vld [vmem:[#allocation5 + $0x18] sm:$0xff]
    %v680 = vld [vmem:[#allocation5 + $0x20] sm:$0xff]
    %v681 = vld [vmem:[#allocation5 + $0x28] sm:$0xff]
    %v682 = vld [vmem:[#allocation5 + $0x30] sm:$0xff]
    %v683 = vld [vmem:[#allocation5 + $0x38] sm:$0xff]
    %v684 = vld [vmem:[#allocation5 + $0x40] sm:$0xff]
    %v685 = vld [vmem:[#allocation5 + $0x48] sm:$0xff]
    %v686 = vld [vmem:[#allocation5 + $0x50] sm:$0xff]
    %v687 = vld [vmem:[#allocation5 + $0x58] sm:$0xff]
    %v688 = vld [vmem:[#allocation5 + $0x60] sm:$0xff]
    %v689 = vld [vmem:[#allocation5 + $0x68] sm:$0xff]
    %v690 = vld [vmem:[#allocation5 + $0x70] sm:$0xff]
    %v691 = vld [vmem:[#allocation5 + $0x78] sm:$0xff]
    %v692 = vld [vmem:[#allocation5 + $0x80] sm:$0xff]
    %v693 = vld [vmem:[#allocation5 + $0x88] sm:$0xff]
    %v694 = vld [vmem:[#allocation5 + $0x90] sm:$0xff]
    %v695 = vld [vmem:[#allocation5 + $0x98] sm:$0xff]
    %v696 = vld [vmem:[#allocation5 + $0xa0] sm:$0xff]
    %v697 = vld [vmem:[#allocation5 + $0xa8] sm:$0xff]
    %v698 = vld [vmem:[#allocation5 + $0xb0] sm:$0xff]
    %v699 = vld [vmem:[#allocation5 + $0xb8] sm:$0xff]
    %v700 = vld [vmem:[#allocation5 + $0xc0] sm:$0xff]
    %v701 = vld [vmem:[#allocation5 + $0xc8] sm:$0xff]
    %v702 = vld [vmem:[#allocation5 + $0xd0] sm:$0xff]
    %v703 = vld [vmem:[#allocation5 + $0xd8] sm:$0xff]
    %v704 = vld [vmem:[#allocation5 + $0xe0] sm:$0xff]
    %v705 = vld [vmem:[#allocation5 + $0xe8] sm:$0xff]
    %v706 = vld [vmem:[#allocation5 + $0xf0] sm:$0xff]
    %v707 = vld [vmem:[#allocation5 + $0xf8] sm:$0xff]
    %v708 = vld [vmem:[%s7] sm:$0x3]
    %v710 = vlaneseq
    %v711 = vshrl.u32 %v710, 7
    %v712 = vsub.s32 0, %v711
    %v713 = vrot.slane %v708, %v712
    %v714 = vlaneseq
    %v715 = vshrl.u32 %v714, 7
    %v716 = vsub.s32 1, %v715
    %v717 = vrot.slane %v708, %v716
    %v752 = vunpack.c.l.b16 %v676
    %v753 = vunpack.c.h.b16 %v676
    %v754 = vunpack.c.l.b16 %v677
    %v755 = vunpack.c.h.b16 %v677
    %v756 = vunpack.c.l.b16 %v678
    %v757 = vunpack.c.h.b16 %v678
    %v758 = vunpack.c.l.b16 %v679
    %v759 = vunpack.c.h.b16 %v679
    %v760 = vunpack.c.l.b16 %v680
    %v761 = vunpack.c.h.b16 %v680
    %v762 = vunpack.c.l.b16 %v681
    %v763 = vunpack.c.h.b16 %v681
    %v764 = vunpack.c.l.b16 %v682
    %v765 = vunpack.c.h.b16 %v682
    %v766 = vunpack.c.l.b16 %v683
    %v767 = vunpack.c.h.b16 %v683
    %v768 = vunpack.c.l.b16 %v684
    %v769 = vunpack.c.h.b16 %v684
    %v770 = vunpack.c.l.b16 %v685
    %v771 = vunpack.c.h.b16 %v685
    %v772 = vunpack.c.l.b16 %v686
    %v773 = vunpack.c.h.b16 %v686
    %v774 = vunpack.c.l.b16 %v687
    %v775 = vunpack.c.h.b16 %v687
    %v776 = vunpack.c.l.b16 %v688
    %v777 = vunpack.c.h.b16 %v688
    %v778 = vunpack.c.l.b16 %v689
    %v779 = vunpack.c.h.b16 %v689
    %v780 = vunpack.c.l.b16 %v690
    %v781 = vunpack.c.h.b16 %v690
    %v782 = vunpack.c.l.b16 %v691
    %v783 = vunpack.c.h.b16 %v691
    %v784 = vunpack.c.l.b16 %v692
    %v785 = vunpack.c.h.b16 %v692
    %v786 = vunpack.c.l.b16 %v693
    %v787 = vunpack.c.h.b16 %v693
    %v788 = vunpack.c.l.b16 %v694
    %v789 = vunpack.c.h.b16 %v694
    %v790 = vunpack.c.l.b16 %v695
    %v791 = vunpack.c.h.b16 %v695
    %v792 = vunpack.c.l.b16 %v696
    %v793 = vunpack.c.h.b16 %v696
    %v794 = vunpack.c.l.b16 %v697
    %v795 = vunpack.c.h.b16 %v697
    %v796 = vunpack.c.l.b16 %v698
    %v797 = vunpack.c.h.b16 %v698
    %v798 = vunpack.c.l.b16 %v699
    %v799 = vunpack.c.h.b16 %v699
    %v800 = vunpack.c.l.b16 %v700
    %v801 = vunpack.c.h.b16 %v700
    %v802 = vunpack.c.l.b16 %v701
    %v803 = vunpack.c.h.b16 %v701
    %v804 = vunpack.c.l.b16 %v702
    %v805 = vunpack.c.h.b16 %v702
    %v806 = vunpack.c.l.b16 %v703
    %v807 = vunpack.c.h.b16 %v703
    %v808 = vunpack.c.l.b16 %v704
    %v809 = vunpack.c.h.b16 %v704
    %v810 = vunpack.c.l.b16 %v705
    %v811 = vunpack.c.h.b16 %v705
    %v812 = vunpack.c.l.b16 %v706
    %v813 = vunpack.c.h.b16 %v706
    %v814 = vunpack.c.l.b16 %v707
    %v815 = vunpack.c.h.b16 %v707
    %v816 = vpack.c.b16 %v754, %v752
    %v817 = vpack.c.b16 %v755, %v753
    %v818 = vpack.c.b16 %v758, %v756
    %v819 = vpack.c.b16 %v759, %v757
    %v820 = vpack.c.b16 %v762, %v760
    %v821 = vpack.c.b16 %v763, %v761
    %v822 = vpack.c.b16 %v766, %v764
    %v823 = vpack.c.b16 %v767, %v765
    %v824 = vpack.c.b16 %v770, %v768
    %v825 = vpack.c.b16 %v771, %v769
    %v826 = vpack.c.b16 %v774, %v772
    %v827 = vpack.c.b16 %v775, %v773
    %v828 = vpack.c.b16 %v778, %v776
    %v829 = vpack.c.b16 %v779, %v777
    %v830 = vpack.c.b16 %v782, %v780
    %v831 = vpack.c.b16 %v783, %v781
    %v832 = vpack.c.b16 %v786, %v784
    %v833 = vpack.c.b16 %v787, %v785
    %v834 = vpack.c.b16 %v790, %v788
    %v835 = vpack.c.b16 %v791, %v789
    %v836 = vpack.c.b16 %v794, %v792
    %v837 = vpack.c.b16 %v795, %v793
    %v838 = vpack.c.b16 %v798, %v796
    %v839 = vpack.c.b16 %v799, %v797
    %v840 = vpack.c.b16 %v802, %v800
    %v841 = vpack.c.b16 %v803, %v801
    %v842 = vpack.c.b16 %v806, %v804
    %v843 = vpack.c.b16 %v807, %v805
    %v844 = vpack.c.b16 %v810, %v808
    %v845 = vpack.c.b16 %v811, %v809
    %v846 = vpack.c.b16 %v814, %v812
    %v847 = vpack.c.b16 %v815, %v813
    %880 = vmatprep.subr.bf16.mxu0 %v817
    %881 = vmatpush1.bf16.msra.mxu0 %v816
    %882 = vmatprep.subr.bf16.mxu0 %v819
    %883 = vmatpush1.bf16.msra.mxu0 %v818
    %884 = vmatprep.subr.bf16.mxu0 %v821
    %885 = vmatpush1.bf16.msra.mxu0 %v820
    %886 = vmatprep.subr.bf16.mxu0 %v823
    %887 = vmatpush1.bf16.msra.mxu0 %v822
    %888 = vmatprep.subr.bf16.mxu0 %v825
    %889 = vmatpush1.bf16.msra.mxu0 %v824
    %890 = vmatprep.subr.bf16.mxu0 %v827
    %891 = vmatpush1.bf16.msra.mxu0 %v826
    %892 = vmatprep.subr.bf16.mxu0 %v829
    %893 = vmatpush1.bf16.msra.mxu0 %v828
    %894 = vmatprep.subr.bf16.mxu0 %v831
    %895 = vmatpush1.bf16.msra.mxu0 %v830
    %896 = vmatprep.subr.bf16.mxu0 %v833
    %897 = vmatpush1.bf16.msra.mxu0 %v832
    %898 = vmatprep.subr.bf16.mxu0 %v835
    %899 = vmatpush1.bf16.msra.mxu0 %v834
    %900 = vmatprep.subr.bf16.mxu0 %v837
    %901 = vmatpush1.bf16.msra.mxu0 %v836
    %902 = vmatprep.subr.bf16.mxu0 %v839
    %903 = vmatpush1.bf16.msra.mxu0 %v838
    %904 = vmatprep.subr.bf16.mxu0 %v841
    %905 = vmatpush1.bf16.msra.mxu0 %v840
    %906 = vmatprep.subr.bf16.mxu0 %v843
    %907 = vmatpush1.bf16.msra.mxu0 %v842
    %908 = vmatprep.subr.bf16.mxu0 %v845
    %909 = vmatpush1.bf16.msra.mxu0 %v844
    %910 = vmatprep.subr.bf16.mxu0 %v847
    %911 = vmatpush1.bf16.msra.mxu0 %v846
    %912 = vmatprep.mubr.bf16.mxu0 %v661
    %913 = vmatmul.mubr.bf16.gmra.mrb[0].mxu0 %v660
    %v914 = vpop.f32.mrb[0].mxu0
    %v915 = vadd.f32 %v713, %v914
    %v916 = vpop.f32.mrb[0].mxu0
    %v917 = vadd.f32 %v717, %v916
    %v918 = vpop.f32.mrb[0].mxu0
    %v919 = vadd.f32 %v713, %v918
    %v920 = vpop.f32.mrb[0].mxu0
    %v921 = vadd.f32 %v717, %v920
    %922 = vmatprep.mubr.bf16.mxu0 %v663
    %923 = vmatmul.mubr.bf16.gmra.mrb[0].mxu0 %v662
    %v924 = vpop.f32.mrb[0].mxu0
    %v925 = vadd.f32 %v713, %v924
    %v926 = vpop.f32.mrb[0].mxu0
    %v927 = vadd.f32 %v717, %v926
    %v928 = vpop.f32.mrb[0].mxu0
    %v929 = vadd.f32 %v713, %v928
    %v930 = vpop.f32.mrb[0].mxu0
    %v931 = vadd.f32 %v717, %v930
    %932 = vmatprep.mubr.bf16.mxu0 %v665
    %933 = vmatmul.mubr.bf16.gmra.mrb[0].mxu0 %v664
    %v934 = vpop.f32.mrb[0].mxu0
    %v935 = vadd.f32 %v713, %v934
    %v936 = vpop.f32.mrb[0].mxu0
    %v937 = vadd.f32 %v717, %v936
    %v938 = vpop.f32.mrb[0].mxu0
    %v939 = vadd.f32 %v713, %v938
    %v940 = vpop.f32.mrb[0].mxu0
    %v941 = vadd.f32 %v717, %v940
    %942 = vmatprep.mubr.bf16.mxu0 %v667
    %943 = vmatmul.mubr.bf16.gmra.mrb[0].mxu0 %v666
    %v944 = vpop.f32.mrb[0].mxu0
    %v945 = vadd.f32 %v713, %v944
    %v946 = vpop.f32.mrb[0].mxu0
    %v947 = vadd.f32 %v717, %v946
    %v948 = vpop.f32.mrb[0].mxu0
    %v949 = vadd.f32 %v713, %v948
    %v950 = vpop.f32.mrb[0].mxu0
    %v951 = vadd.f32 %v717, %v950
    %952 = vmatprep.mubr.bf16.mxu0 %v669
    %953 = vmatmul.mubr.bf16.gmra.mrb[0].mxu0 %v668
    %v954 = vpop.f32.mrb[0].mxu0
    %v955 = vadd.f32 %v713, %v954
    %v956 = vpop.f32.mrb[0].mxu0
    %v957 = vadd.f32 %v717, %v956
    %v958 = vpop.f32.mrb[0].mxu0
    %v959 = vadd.f32 %v713, %v958
    %v960 = vpop.f32.mrb[0].mxu0
    %v961 = vadd.f32 %v717, %v960
    %962 = vmatprep.mubr.bf16.mxu0 %v671
    %963 = vmatmul.mubr.bf16.gmra.mrb[0].mxu0 %v670
    %v964 = vpop.f32.mrb[0].mxu0
    %v965 = vadd.f32 %v713, %v964
    %v966 = vpop.f32.mrb[0].mxu0
    %v967 = vadd.f32 %v717, %v966
    %v968 = vpop.f32.mrb[0].mxu0
    %v969 = vadd.f32 %v713, %v968
    %v970 = vpop.f32.mrb[0].mxu0
    %v971 = vadd.f32 %v717, %v970
    %972 = vmatprep.mubr.bf16.mxu0 %v673
    %973 = vmatmul.mubr.bf16.gmra.mrb[0].mxu0 %v672
    %v974 = vpop.f32.mrb[0].mxu0
    %v975 = vadd.f32 %v713, %v974
    %v976 = vpop.f32.mrb[0].mxu0
    %v977 = vadd.f32 %v717, %v976
    %v978 = vpop.f32.mrb[0].mxu0
    %v979 = vadd.f32 %v713, %v978
    %v980 = vpop.f32.mrb[0].mxu0
    %v981 = vadd.f32 %v717, %v980
    %982 = vmatprep.mubr.bf16.mxu0 %v675
    %983 = vmatmul.mubr.bf16.gmra.mrb[0].mxu0 %v674
    %v984 = vpop.f32.mrb[0].mxu0
    %v985 = vadd.f32 %v713, %v984
    %v986 = vpop.f32.mrb[0].mxu0
    %v987 = vadd.f32 %v717, %v986
    %v988 = vpop.f32.mrb[0].mxu0
    %v989 = vadd.f32 %v713, %v988
    %v990 = vpop.f32.mrb[0].mxu0
    %v991 = vadd.f32 %v717, %v990
    %992 = vdwg.mxu0
    %v993 = vmax.f32 %v915, 0.0
    %v994 = vmax.f32 %v917, 0.0
    %v995 = vmax.f32 %v919, 0.0
    %v996 = vmax.f32 %v921, 0.0
    %v997 = vmax.f32 %v925, 0.0
    %v998 = vmax.f32 %v927, 0.0
    %v999 = vmax.f32 %v929, 0.0
    %v1000 = vmax.f32 %v931, 0.0
    %v1001 = vmax.f32 %v935, 0.0
    %v1002 = vmax.f32 %v937, 0.0
    %v1003 = vmax.f32 %v939, 0.0
    %v1004 = vmax.f32 %v941, 0.0
    %v1005 = vmax.f32 %v945, 0.0
    %v1006 = vmax.f32 %v947, 0.0
    %v1007 = vmax.f32 %v949, 0.0
    %v1008 = vmax.f32 %v951, 0.0
    %v1009 = vmax.f32 %v955, 0.0
    %v1010 = vmax.f32 %v957, 0.0
    %v1011 = vmax.f32 %v959, 0.0
    %v1012 = vmax.f32 %v961, 0.0
    %v1013 = vmax.f32 %v965, 0.0
    %v1014 = vmax.f32 %v967, 0.0
    %v1015 = vmax.f32 %v969, 0.0
    %v1016 = vmax.f32 %v971, 0.0
    %v1017 = vmax.f32 %v975, 0.0
    %v1018 = vmax.f32 %v977, 0.0
    %v1019 = vmax.f32 %v979, 0.0
    %v1020 = vmax.f32 %v981, 0.0
    %v1021 = vmax.f32 %v985, 0.0
    %v1022 = vmax.f32 %v987, 0.0
    %v1023 = vmax.f32 %v989, 0.0
    %v1024 = vmax.f32 %v991, 0.0
    %v1025 = vpack.c.bf16 %v995, %v993
    %v1026 = vpack.c.bf16 %v996, %v994
    %v1027 = vpack.c.bf16 %v999, %v997
    %v1028 = vpack.c.bf16 %v1000, %v998
    %v1029 = vpack.c.bf16 %v1003, %v1001
    %v1030 = vpack.c.bf16 %v1004, %v1002
    %v1031 = vpack.c.bf16 %v1007, %v1005
    %v1032 = vpack.c.bf16 %v1008, %v1006
    %v1033 = vpack.c.bf16 %v1011, %v1009
    %v1034 = vpack.c.bf16 %v1012, %v1010
    %v1035 = vpack.c.bf16 %v1015, %v1013
    %v1036 = vpack.c.bf16 %v1016, %v1014
    %v1037 = vpack.c.bf16 %v1019, %v1017
    %v1038 = vpack.c.bf16 %v1020, %v1018
    %v1039 = vpack.c.bf16 %v1023, %v1021
    %v1040 = vpack.c.bf16 %v1024, %v1022
    %v1041 = vld [vmem:[%s8] sm:$0xf]
    %v1042 = vld [vmem:[%s8 + $0x4] sm:$0xf]
    %v1043 = vld [vmem:[%s8 + $0x8] sm:$0xf]
    %v1044 = vld [vmem:[%s8 + $0xc] sm:$0xf]
    %v1045 = vld [vmem:[%s8 + $0x10] sm:$0xf]
    %v1046 = vld [vmem:[%s8 + $0x14] sm:$0xf]
    %v1047 = vld [vmem:[%s8 + $0x18] sm:$0xf]
    %v1048 = vld [vmem:[%s8 + $0x1c] sm:$0xf]
    %v1049 = vld [vmem:[%s8 + $0x20] sm:$0xf]
    %v1050 = vld [vmem:[%s8 + $0x24] sm:$0xf]
    %v1051 = vld [vmem:[%s8 + $0x28] sm:$0xf]
    %v1052 = vld [vmem:[%s8 + $0x2c] sm:$0xf]
    %v1053 = vld [vmem:[%s8 + $0x30] sm:$0xf]
    %v1054 = vld [vmem:[%s8 + $0x34] sm:$0xf]
    %v1055 = vld [vmem:[%s8 + $0x38] sm:$0xf]
    %v1056 = vld [vmem:[%s8 + $0x3c] sm:$0xf]
    %v1057 = vld [vmem:[%s8 + $0x40] sm:$0xf]
    %v1058 = vld [vmem:[%s8 + $0x44] sm:$0xf]
    %v1059 = vld [vmem:[%s8 + $0x48] sm:$0xf]
    %v1060 = vld [vmem:[%s8 + $0x4c] sm:$0xf]
    %v1061 = vld [vmem:[%s8 + $0x50] sm:$0xf]
    %v1062 = vld [vmem:[%s8 + $0x54] sm:$0xf]
    %v1063 = vld [vmem:[%s8 + $0x58] sm:$0xf]
    %v1064 = vld [vmem:[%s8 + $0x5c] sm:$0xf]
    %v1065 = vld [vmem:[%s8 + $0x60] sm:$0xf]
    %v1066 = vld [vmem:[%s8 + $0x64] sm:$0xf]
    %v1067 = vld [vmem:[%s8 + $0x68] sm:$0xf]
    %v1068 = vld [vmem:[%s8 + $0x6c] sm:$0xf]
    %v1069 = vld [vmem:[%s8 + $0x70] sm:$0xf]
    %v1070 = vld [vmem:[%s8 + $0x74] sm:$0xf]
    %v1071 = vld [vmem:[%s8 + $0x78] sm:$0xf]
    %v1072 = vld [vmem:[%s8 + $0x7c] sm:$0xf]
    %v1073 = vld [vmem:[%s9] sm:$0x1]
    %v1075 = vlaneseq
    %v1076 = vshrl.u32 %v1075, 7
    %v1077 = vsub.s32 0, %v1076
    %v1078 = vrot.slane %v1073, %v1077
    %v1112 = vunpack.c.l.b16 %v1041
    %v1113 = vunpack.c.l.b16 %v1042
    %v1114 = vunpack.c.l.b16 %v1043
    %v1115 = vunpack.c.l.b16 %v1044
    %v1116 = vunpack.c.l.b16 %v1045
    %v1117 = vunpack.c.l.b16 %v1046
    %v1118 = vunpack.c.l.b16 %v1047
    %v1119 = vunpack.c.l.b16 %v1048
    %v1120 = vunpack.c.l.b16 %v1049
    %v1121 = vunpack.c.l.b16 %v1050
    %v1122 = vunpack.c.l.b16 %v1051
    %v1123 = vunpack.c.l.b16 %v1052
    %v1124 = vunpack.c.l.b16 %v1053
    %v1125 = vunpack.c.l.b16 %v1054
    %v1126 = vunpack.c.l.b16 %v1055
    %v1127 = vunpack.c.l.b16 %v1056
    %v1128 = vunpack.c.l.b16 %v1057
    %v1129 = vunpack.c.l.b16 %v1058
    %v1130 = vunpack.c.l.b16 %v1059
    %v1131 = vunpack.c.l.b16 %v1060
    %v1132 = vunpack.c.l.b16 %v1061
    %v1133 = vunpack.c.l.b16 %v1062
    %v1134 = vunpack.c.l.b16 %v1063
    %v1135 = vunpack.c.l.b16 %v1064
    %v1136 = vunpack.c.l.b16 %v1065
    %v1137 = vunpack.c.l.b16 %v1066
    %v1138 = vunpack.c.l.b16 %v1067
    %v1139 = vunpack.c.l.b16 %v1068
    %v1140 = vunpack.c.l.b16 %v1069
    %v1141 = vunpack.c.l.b16 %v1070
    %v1142 = vunpack.c.l.b16 %v1071
    %v1143 = vunpack.c.l.b16 %v1072
    %v1144 = vpack.c.b16 %v1113, %v1112
    %v1145 = vpack.c.b16 %v1115, %v1114
    %v1146 = vpack.c.b16 %v1117, %v1116
    %v1147 = vpack.c.b16 %v1119, %v1118
    %v1148 = vpack.c.b16 %v1121, %v1120
    %v1149 = vpack.c.b16 %v1123, %v1122
    %v1150 = vpack.c.b16 %v1125, %v1124
    %v1151 = vpack.c.b16 %v1127, %v1126
    %v1152 = vpack.c.b16 %v1129, %v1128
    %v1153 = vpack.c.b16 %v1131, %v1130
    %v1154 = vpack.c.b16 %v1133, %v1132
    %v1155 = vpack.c.b16 %v1135, %v1134
    %v1156 = vpack.c.b16 %v1137, %v1136
    %v1157 = vpack.c.b16 %v1139, %v1138
    %v1158 = vpack.c.b16 %v1141, %v1140
    %v1159 = vpack.c.b16 %v1143, %v1142
    %1176 = vmatprep.subr.bf16.mxu0 0
    %1177 = vmatpush1.bf16.msra.mxu0 %v1144
    %1178 = vmatprep.subr.bf16.mxu0 0
    %1179 = vmatpush1.bf16.msra.mxu0 %v1145
    %1180 = vmatprep.subr.bf16.mxu0 0
    %1181 = vmatpush1.bf16.msra.mxu0 %v1146
    %1182 = vmatprep.subr.bf16.mxu0 0
    %1183 = vmatpush1.bf16.msra.mxu0 %v1147
    %1184 = vmatprep.subr.bf16.mxu0 0
    %1185 = vmatpush1.bf16.msra.mxu0 %v1148
    %1186 = vmatprep.subr.bf16.mxu0 0
    %1187 = vmatpush1.bf16.msra.mxu0 %v1149
    %1188 = vmatprep.subr.bf16.mxu0 0
    %1189 = vmatpush1.bf16.msra.mxu0 %v1150
    %1190 = vmatprep.subr.bf16.mxu0 0
    %1191 = vmatpush1.bf16.msra.mxu0 %v1151
    %1192 = vmatprep.subr.bf16.mxu0 0
    %1193 = vmatpush1.bf16.msra.mxu0 %v1152
    %1194 = vmatprep.subr.bf16.mxu0 0
    %1195 = vmatpush1.bf16.msra.mxu0 %v1153
    %1196 = vmatprep.subr.bf16.mxu0 0
    %1197 = vmatpush1.bf16.msra.mxu0 %v1154
    %1198 = vmatprep.subr.bf16.mxu0 0
    %1199 = vmatpush1.bf16.msra.mxu0 %v1155
    %1200 = vmatprep.subr.bf16.mxu0 0
    %1201 = vmatpush1.bf16.msra.mxu0 %v1156
    %1202 = vmatprep.subr.bf16.mxu0 0
    %1203 = vmatpush1.bf16.msra.mxu0 %v1157
    %1204 = vmatprep.subr.bf16.mxu0 0
    %1205 = vmatpush1.bf16.msra.mxu0 %v1158
    %1206 = vmatprep.subr.bf16.mxu0 0
    %1207 = vmatpush1.bf16.msra.mxu0 %v1159
    %1208 = vmatprep.mubr.bf16.mxu0 %v1026
    %1209 = vmatmul.mubr.bf16.gmra.mrb[0].mxu0 %v1025
    %v1210 = vpop.f32.mrb[0].mxu0
    %v1211 = vadd.f32 %v1078, %v1210
    %v1212 = vpop.f32.mrb[0].mxu0
    %v1213 = vpop.f32.mrb[0].mxu0
    %v1214 = vadd.f32 %v1078, %v1213
    %v1215 = vpop.f32.mrb[0].mxu0
    %1216 = vmatprep.mubr.bf16.mxu0 %v1028
    %1217 = vmatmul.mubr.bf16.gmra.mrb[0].mxu0 %v1027
    %v1218 = vpop.f32.mrb[0].mxu0
    %v1219 = vadd.f32 %v1078, %v1218
    %v1220 = vpop.f32.mrb[0].mxu0
    %v1221 = vpop.f32.mrb[0].mxu0
    %v1222 = vadd.f32 %v1078, %v1221
    %v1223 = vpop.f32.mrb[0].mxu0
    %1224 = vmatprep.mubr.bf16.mxu0 %v1030
    %1225 = vmatmul.mubr.bf16.gmra.mrb[0].mxu0 %v1029
    %v1226 = vpop.f32.mrb[0].mxu0
    %v1227 = vadd.f32 %v1078, %v1226
    %v1228 = vpop.f32.mrb[0].mxu0
    %v1229 = vpop.f32.mrb[0].mxu0
    %v1230 = vadd.f32 %v1078, %v1229
    %v1231 = vpop.f32.mrb[0].mxu0
    %1232 = vmatprep.mubr.bf16.mxu0 %v1032
    %1233 = vmatmul.mubr.bf16.gmra.mrb[0].mxu0 %v1031
    %v1234 = vpop.f32.mrb[0].mxu0
    %v1235 = vadd.f32 %v1078, %v1234
    %v1236 = vpop.f32.mrb[0].mxu0
    %v1237 = vpop.f32.mrb[0].mxu0
    %v1238 = vadd.f32 %v1078, %v1237
    %v1239 = vpop.f32.mrb[0].mxu0
    %1240 = vmatprep.mubr.bf16.mxu0 %v1034
    %1241 = vmatmul.mubr.bf16.gmra.mrb[0].mxu0 %v1033
    %v1242 = vpop.f32.mrb[0].mxu0
    %v1243 = vadd.f32 %v1078, %v1242
    %v1244 = vpop.f32.mrb[0].mxu0
    %v1245 = vpop.f32.mrb[0].mxu0
    %v1246 = vadd.f32 %v1078, %v1245
    %v1247 = vpop.f32.mrb[0].mxu0
    %1248 = vmatprep.mubr.bf16.mxu0 %v1036
    %1249 = vmatmul.mubr.bf16.gmra.mrb[0].mxu0 %v1035
    %v1250 = vpop.f32.mrb[0].mxu0
    %v1251 = vadd.f32 %v1078, %v1250
    %v1252 = vpop.f32.mrb[0].mxu0
    %v1253 = vpop.f32.mrb[0].mxu0
    %v1254 = vadd.f32 %v1078, %v1253
    %v1255 = vpop.f32.mrb[0].mxu0
    %1256 = vmatprep.mubr.bf16.mxu0 %v1038
    %1257 = vmatmul.mubr.bf16.gmra.mrb[0].mxu0 %v1037
    %v1258 = vpop.f32.mrb[0].mxu0
    %v1259 = vadd.f32 %v1078, %v1258
    %v1260 = vpop.f32.mrb[0].mxu0
    %v1261 = vpop.f32.mrb[0].mxu0
    %v1262 = vadd.f32 %v1078, %v1261
    %v1263 = vpop.f32.mrb[0].mxu0
    %1264 = vmatprep.mubr.bf16.mxu0 %v1040
    %1265 = vmatmul.mubr.bf16.gmra.mrb[0].mxu0 %v1039
    %v1266 = vpop.f32.mrb[0].mxu0
    %v1267 = vadd.f32 %v1078, %v1266
    %v1268 = vpop.f32.mrb[0].mxu0
    %v1269 = vpop.f32.mrb[0].mxu0
    %v1270 = vadd.f32 %v1078, %v1269
    %v1271 = vpop.f32.mrb[0].mxu0
    %1272 = vdwg.mxu0
    %v1273 = vmul.f32 %v1211, 0.001
    %v1274 = vmul.f32 %v1214, 0.001
    %v1275 = vmul.f32 %v1219, 0.001
    %v1276 = vmul.f32 %v1222, 0.001
    %v1277 = vmul.f32 %v1227, 0.001
    %v1278 = vmul.f32 %v1230, 0.001
    %v1279 = vmul.f32 %v1235, 0.001
    %v1280 = vmul.f32 %v1238, 0.001
    %v1281 = vmul.f32 %v1243, 0.001
    %v1282 = vmul.f32 %v1246, 0.001
    %v1283 = vmul.f32 %v1251, 0.001
    %v1284 = vmul.f32 %v1254, 0.001
    %v1285 = vmul.f32 %v1259, 0.001
    %v1286 = vmul.f32 %v1262, 0.001
    %v1287 = vmul.f32 %v1267, 0.001
    %v1288 = vmul.f32 %v1270, 0.001
    %v1289 = vxor.u32 %v1273, 2147483648
    %v1290 = vxor.u32 %v1274, 2147483648
    %v1291 = vxor.u32 %v1275, 2147483648
    %v1292 = vxor.u32 %v1276, 2147483648
    %v1293 = vxor.u32 %v1277, 2147483648
    %v1294 = vxor.u32 %v1278, 2147483648
    %v1295 = vxor.u32 %v1279, 2147483648
    %v1296 = vxor.u32 %v1280, 2147483648
    %v1297 = vxor.u32 %v1281, 2147483648
    %v1298 = vxor.u32 %v1282, 2147483648
    %v1299 = vxor.u32 %v1283, 2147483648
    %v1300 = vxor.u32 %v1284, 2147483648
    %v1301 = vxor.u32 %v1285, 2147483648
    %v1302 = vxor.u32 %v1286, 2147483648
    %v1303 = vxor.u32 %v1287, 2147483648
    %v1304 = vxor.u32 %v1288, 2147483648
    %v1305 = vmul.f32 %v1289, 1.442695
    %v1306 = vpow.pop %v1305
    %v1307 = vmul.f32 %v1290, 1.442695
    %v1308 = vpow.pop %v1307
    %v1309 = vmul.f32 %v1291, 1.442695
    %v1310 = vpow.pop %v1309
    %v1311 = vmul.f32 %v1292, 1.442695
    %v1312 = vpow.pop %v1311
    %v1313 = vmul.f32 %v1293, 1.442695
    %v1314 = vpow.pop %v1313
    %v1315 = vmul.f32 %v1294, 1.442695
    %v1316 = vpow.pop %v1315
    %v1317 = vmul.f32 %v1295, 1.442695
    %v1318 = vpow.pop %v1317
    %v1319 = vmul.f32 %v1296, 1.442695
    %v1320 = vpow.pop %v1319
    %v1321 = vmul.f32 %v1297, 1.442695
    %v1322 = vpow.pop %v1321
    %v1323 = vmul.f32 %v1298, 1.442695
    %v1324 = vpow.pop %v1323
    %v1325 = vmul.f32 %v1299, 1.442695
    %v1326 = vpow.pop %v1325
    %v1327 = vmul.f32 %v1300, 1.442695
    %v1328 = vpow.pop %v1327
    %v1329 = vmul.f32 %v1301, 1.442695
    %v1330 = vpow.pop %v1329
    %v1331 = vmul.f32 %v1302, 1.442695
    %v1332 = vpow.pop %v1331
    %v1333 = vmul.f32 %v1303, 1.442695
    %v1334 = vpow.pop %v1333
    %v1335 = vmul.f32 %v1304, 1.442695
    %v1336 = vpow.pop %v1335
    %v1337 = vadd.f32 %v1306, 1.0
    %v1338 = vadd.f32 %v1308, 1.0
    %v1339 = vadd.f32 %v1310, 1.0
    %v1340 = vadd.f32 %v1312, 1.0
    %v1341 = vadd.f32 %v1314, 1.0
    %v1342 = vadd.f32 %v1316, 1.0
    %v1343 = vadd.f32 %v1318, 1.0
    %v1344 = vadd.f32 %v1320, 1.0
    %v1345 = vadd.f32 %v1322, 1.0
    %v1346 = vadd.f32 %v1324, 1.0
    %v1347 = vadd.f32 %v1326, 1.0
    %v1348 = vadd.f32 %v1328, 1.0
    %v1349 = vadd.f32 %v1330, 1.0
    %v1350 = vadd.f32 %v1332, 1.0
    %v1351 = vadd.f32 %v1334, 1.0
    %v1352 = vadd.f32 %v1336, 1.0
    %v1353 = vrcp.pop %v1337
    %v1354 = vmul.f32 1.0, %v1353
    %v1355 = vrcp.pop %v1338
    %v1356 = vmul.f32 1.0, %v1355
    %v1357 = vrcp.pop %v1339
    %v1358 = vmul.f32 1.0, %v1357
    %v1359 = vrcp.pop %v1340
    %v1360 = vmul.f32 1.0, %v1359
    %v1361 = vrcp.pop %v1341
    %v1362 = vmul.f32 1.0, %v1361
    %v1363 = vrcp.pop %v1342
    %v1364 = vmul.f32 1.0, %v1363
    %v1365 = vrcp.pop %v1343
    %v1366 = vmul.f32 1.0, %v1365
    %v1367 = vrcp.pop %v1344
    %v1368 = vmul.f32 1.0, %v1367
    %v1369 = vrcp.pop %v1345
    %v1370 = vmul.f32 1.0, %v1369
    %v1371 = vrcp.pop %v1346
    %v1372 = vmul.f32 1.0, %v1371
    %v1373 = vrcp.pop %v1347
    %v1374 = vmul.f32 1.0, %v1373
    %v1375 = vrcp.pop %v1348
    %v1376 = vmul.f32 1.0, %v1375
    %v1377 = vrcp.pop %v1349
    %v1378 = vmul.f32 1.0, %v1377
    %v1379 = vrcp.pop %v1350
    %v1380 = vmul.f32 1.0, %v1379
    %v1381 = vrcp.pop %v1351
    %v1382 = vmul.f32 1.0, %v1381
    %v1383 = vrcp.pop %v1352
    %v1384 = vmul.f32 1.0, %v1383
    %v1385 = vstv %s64
    %v1386 = vmul.f32 %v1354, %v1385
    %v1387 = vmul.f32 %v1356, %v1385
    %v1388 = vmul.f32 %v1358, %v1385
    %v1389 = vmul.f32 %v1360, %v1385
    %v1390 = vmul.f32 %v1362, %v1385
    %v1391 = vmul.f32 %v1364, %v1385
    %v1392 = vmul.f32 %v1366, %v1385
    %v1393 = vmul.f32 %v1368, %v1385
    %v1394 = vmul.f32 %v1370, %v1385
    %v1395 = vmul.f32 %v1372, %v1385
    %v1396 = vmul.f32 %v1374, %v1385
    %v1397 = vmul.f32 %v1376, %v1385
    %v1398 = vmul.f32 %v1378, %v1385
    %v1399 = vmul.f32 %v1380, %v1385
    %v1400 = vmul.f32 %v1382, %v1385
    %v1401 = vmul.f32 %v1384, %v1385
    %v1402 = vstv %s63
    %v1403 = vadd.f32 %v1386, %v1402
    %v1404 = vadd.f32 %v1387, %v1402
    %v1405 = vadd.f32 %v1388, %v1402
    %v1406 = vadd.f32 %v1389, %v1402
    %v1407 = vadd.f32 %v1390, %v1402
    %v1408 = vadd.f32 %v1391, %v1402
    %v1409 = vadd.f32 %v1392, %v1402
    %v1410 = vadd.f32 %v1393, %v1402
    %v1411 = vadd.f32 %v1394, %v1402
    %v1412 = vadd.f32 %v1395, %v1402
    %v1413 = vadd.f32 %v1396, %v1402
    %v1414 = vadd.f32 %v1397, %v1402
    %v1415 = vadd.f32 %v1398, %v1402
    %v1416 = vadd.f32 %v1399, %v1402
    %v1417 = vadd.f32 %v1400, %v1402
    %v1418 = vadd.f32 %v1401, %v1402
    %v1419 = vlaneseq
    %v1420 = vand.u32 %v1419, 127
    %vm1421 = vcmp.eq.s32.totalorder %v1420, 1
    %v1422 = vsel %vm1421, %v1403, %v1211
    %v1423 = vsel %vm1421, %v1404, %v1214
    %v1424 = vsel %vm1421, %v1405, %v1219
    %v1425 = vsel %vm1421, %v1406, %v1222
    %v1426 = vsel %vm1421, %v1407, %v1227
    %v1427 = vsel %vm1421, %v1408, %v1230
    %v1428 = vsel %vm1421, %v1409, %v1235
    %v1429 = vsel %vm1421, %v1410, %v1238
    %v1430 = vsel %vm1421, %v1411, %v1243
    %v1431 = vsel %vm1421, %v1412, %v1246
    %v1432 = vsel %vm1421, %v1413, %v1251
    %v1433 = vsel %vm1421, %v1414, %v1254
    %v1434 = vsel %vm1421, %v1415, %v1259
    %v1435 = vsel %vm1421, %v1416, %v1262
    %v1436 = vsel %vm1421, %v1417, %v1267
    %v1437 = vsel %vm1421, %v1418, %v1270
    %vm1438 = vcmask 64512
    %1439 = vst.msk [vmem:[%s10] sm:$0xff] %vm1438, %v1422
    %1440 = vst.msk [vmem:[%s10 + $0x8] sm:$0xff] %vm1438, %v1423
    %1441 = vst.msk [vmem:[%s10 + $0x10] sm:$0xff] %vm1438, %v1424
    %1442 = vst.msk [vmem:[%s10 + $0x18] sm:$0xff] %vm1438, %v1425
    %1443 = vst.msk [vmem:[%s10 + $0x20] sm:$0xff] %vm1438, %v1426
    %1444 = vst.msk [vmem:[%s10 + $0x28] sm:$0xff] %vm1438, %v1427
    %1445 = vst.msk [vmem:[%s10 + $0x30] sm:$0xff] %vm1438, %v1428
    %1446 = vst.msk [vmem:[%s10 + $0x38] sm:$0xff] %vm1438, %v1429
    %1447 = vst.msk [vmem:[%s10 + $0x40] sm:$0xff] %vm1438, %v1430
    %1448 = vst.msk [vmem:[%s10 + $0x48] sm:$0xff] %vm1438, %v1431
    %1449 = vst.msk [vmem:[%s10 + $0x50] sm:$0xff] %vm1438, %v1432
    %1450 = vst.msk [vmem:[%s10 + $0x58] sm:$0xff] %vm1438, %v1433
    %1451 = vst.msk [vmem:[%s10 + $0x60] sm:$0xff] %vm1438, %v1434
    %1452 = vst.msk [vmem:[%s10 + $0x68] sm:$0xff] %vm1438, %v1435
    %1453 = vst.msk [vmem:[%s10 + $0x70] sm:$0xff] %vm1438, %v1436
    %1454 = vst.msk [vmem:[%s10 + $0x78] sm:$0xff] %vm1438, %v1437
    // Predicated region
    $region50: #{tpu_custom_call.1} parent=1 // pred_check
      _
    $region51: #{tpu_custom_call.1} parent=1 // pred_check_branch
      %1456 = sbr.rel (0) target = $region53
    $region52: #{tpu_custom_call.1} parent=1 // pred_region
      _
    $region53: #{tpu_custom_call.1} parent=1 // pred_fallthru
      _
    // Predicated region
    $region54: #{tpu_custom_call.1} parent=1 // pred_check
      _
    $region55: #{tpu_custom_call.1} parent=1 // pred_check_branch
      %1458 = sbr.rel (0) target = $region57
    $region56: #{tpu_custom_call.1} parent=1 // pred_region
      _
    $region57: #{tpu_custom_call.1} parent=1 // pred_fallthru
      _
    %1459 = vsyncpa [#allocation3], 1
    %1460 = vsyncpa [#allocation4], 1

</llo_original>
